<compile_context>
chip_gen: v7x
topology: tpu7x:2x2x1
jax: 0.10.0
libtpu: 0.0.40
codegen_flags: <defaults>
</compile_context>

<pallas_src>
import functools

import numpy as np
import jax
import jax.numpy as jnp
from jax.experimental import pallas as pl
from jax.experimental.pallas import tpu as pltpu

EPS = 1e-5                      # nn.BatchNorm2d default
VMEM_LIMIT = 48 * 1024 * 1024   # above default scoped limit, < v7x 64 MiB physical


# ----------------------------------------------------------------------------
# Pallas kernels
# ----------------------------------------------------------------------------
def _stack_taps(load_tap, stk_ref, *, W, HW, pad, cin):
    """Stage the 9 shifted 3x3 taps into one (9*cin, HW) stacked MXU operand.

    load_tap(off) -> (cin, HW) bf16 lane-slice of the flat-padded activation.
    Column masks (hoisted, computed once) fix the flat-view row wrap-around:
    the "left of column 0" / "right of column W-1" taps alias the neighbouring
    image row and must contribute zero.
    """
    col = jax.lax.broadcasted_iota(jnp.int32, (1, HW), 1) % W
    mask_l = col != 0
    mask_r = col != (W - 1)
    zero = jnp.zeros((1, HW), stk_ref.dtype)
    for dy in range(3):
        for dx in range(3):
            tap = load_tap(pad + (dy - 1) * W + (dx - 1))
            if dx == 0:
                tap = jnp.where(mask_l, tap, zero)
            elif dx == 2:
                tap = jnp.where(mask_r, tap, zero)
            t = dy * 3 + dx
            stk_ref[t * cin:(t + 1) * cin, :] = tap


def _conv_stats_kernel(x_ref, w_ref, o_ref, st_ref, stk_ref, *, W, HW, pad, cin):
    """conv3x3 (no bias) as ONE stacked-tap MXU matmul + BN partial stats."""
    _stack_taps(lambda off: x_ref[0, :, off:off + HW], stk_ref,
                W=W, HW=HW, pad=pad, cin=cin)
    acc = jnp.dot(w_ref[...], stk_ref[...], preferred_element_type=jnp.float32)
    o_ref[0] = acc
    st_ref[0, :, 0:1] = jnp.sum(acc, axis=1, keepdims=True)
    st_ref[0, :, 1:2] = jnp.sum(acc * acc, axis=1, keepdims=True)


def _bnrelu_conv_stats_kernel(y_ref, s_ref, b_ref, w_ref, o_ref, st_ref,
                              pad_ref, stk_ref, *, W, HW, pad, cmid):
    """Fused: BN(scale/shift)+ReLU prologue -> conv3x3 -> BN partial stats."""
    # BN (batch-stat scale/shift) + ReLU prologue in f32.
    act = jnp.maximum(y_ref[0] * s_ref[...] + b_ref[...], 0.0)
    # Flat-pad staging: zero only the +/-pad halo (not the whole scratch).
    # Re-done every step so the kernel stays correct when the batch axis is
    # sharded across TensorCores (scratch is per-core); the halo is tiny vs HW.
    pad_ref[:, 0:pad] = jnp.zeros((cmid, pad), pad_ref.dtype)
    pad_ref[:, pad + HW:pad + HW + pad] = jnp.zeros((cmid, pad), pad_ref.dtype)
    pad_ref[:, pad:pad + HW] = act.astype(pad_ref.dtype)
    _stack_taps(lambda off: pad_ref[:, off:off + HW], stk_ref,
                W=W, HW=HW, pad=pad, cin=cmid)
    acc = jnp.dot(w_ref[...], stk_ref[...], preferred_element_type=jnp.float32)
    o_ref[0] = acc
    st_ref[0, :, 0:1] = jnp.sum(acc, axis=1, keepdims=True)
    st_ref[0, :, 1:2] = jnp.sum(acc * acc, axis=1, keepdims=True)


def _bn_relu_kernel(x_ref, s_ref, b_ref, o_ref):
    """Final BatchNorm + ReLU (lane-dense elementwise)."""
    o_ref[0] = jnp.maximum(x_ref[0] * s_ref[...] + b_ref[...], 0.0)


# ----------------------------------------------------------------------------
# pallas_call wrappers
# ----------------------------------------------------------------------------
def _lane_pad(W):
    # >= W+1 (one zero image row + 1 element) and a multiple of 128 so in-kernel
    # stores / halo zeroing stay lane-aligned.
    return pl.cdiv(W + 1, 128) * 128


def _conv_bn_stats(x_flat, w, *, H, W):
    N, cin, L = x_flat.shape
    cout = w.shape[0]
    HW = H * W
    pad = _lane_pad(W)
    kern = functools.partial(_conv_stats_kernel, W=W, HW=HW, pad=pad, cin=cin)
    # TODO(synk): at production U-Net sizes add Cout and/or H*W grid axes (the
    # H*W tiles need a +/-pad halo) so the working set fits v7x's 64 MiB VMEM
    # and the second v7x TensorCore gets a parallel extent when N is small.
    return pl.pallas_call(
        kern,
        out_shape=(jax.ShapeDtypeStruct((N, cout, HW), jnp.float32),
                   jax.ShapeDtypeStruct((N, cout, 2), jnp.float32)),
        grid=(N,),
        in_specs=[pl.BlockSpec((1, cin, L), lambda n: (n, 0, 0)),
                  pl.BlockSpec((cout, 9 * cin), lambda n: (0, 0))],
        out_specs=(pl.BlockSpec((1, cout, HW), lambda n: (n, 0, 0)),
                   pl.BlockSpec((1, cout, 2), lambda n: (n, 0, 0))),
        scratch_shapes=[pltpu.VMEM((9 * cin, HW), jnp.bfloat16)],
        compiler_params=pltpu.CompilerParams(
            dimension_semantics=("parallel",),
            vmem_limit_bytes=VMEM_LIMIT),
    )(x_flat, w)


def _bnrelu_conv_bn_stats(conv_prev, scale, shift, w, *, H, W):
    N, cmid, HW = conv_prev.shape
    cout = w.shape[0]
    pad = _lane_pad(W)
    L = HW + 2 * pad
    kern = functools.partial(_bnrelu_conv_stats_kernel, W=W, HW=HW, pad=pad,
                             cmid=cmid)
    return pl.pallas_call(
        kern,
        out_shape=(jax.ShapeDtypeStruct((N, cout, HW), jnp.float32),
                   jax.ShapeDtypeStruct((N, cout, 2), jnp.float32)),
        grid=(N,),
        in_specs=[pl.BlockSpec((1, cmid, HW), lambda n: (n, 0, 0)),
                  pl.BlockSpec((cmid, 1), lambda n: (0, 0)),
                  pl.BlockSpec((cmid, 1), lambda n: (0, 0)),
                  pl.BlockSpec((cout, 9 * cmid), lambda n: (0, 0))],
        out_specs=(pl.BlockSpec((1, cout, HW), lambda n: (n, 0, 0)),
                   pl.BlockSpec((1, cout, 2), lambda n: (n, 0, 0))),
        scratch_shapes=[pltpu.VMEM((cmid, L), jnp.bfloat16),
                        pltpu.VMEM((9 * cmid, HW), jnp.bfloat16)],
        compiler_params=pltpu.CompilerParams(
            dimension_semantics=("parallel",),
            vmem_limit_bytes=VMEM_LIMIT),
    )(conv_prev, scale, shift, w)


def _bn_relu(x, scale, shift):
    N, c, HW = x.shape
    return pl.pallas_call(
        _bn_relu_kernel,
        out_shape=jax.ShapeDtypeStruct((N, c, HW), jnp.float32),
        grid=(N,),
        in_specs=[pl.BlockSpec((1, c, HW), lambda n: (n, 0, 0)),
                  pl.BlockSpec((c, 1), lambda n: (0, 0)),
                  pl.BlockSpec((c, 1), lambda n: (0, 0))],
        out_specs=pl.BlockSpec((1, c, HW), lambda n: (n, 0, 0)),
        compiler_params=pltpu.CompilerParams(
            dimension_semantics=("parallel",),
            vmem_limit_bytes=VMEM_LIMIT),
    )(x, scale, shift)


# ----------------------------------------------------------------------------
# JAX glue (upsample / pad / concat / tiny BN stat reduction)
# ----------------------------------------------------------------------------
def _interp_matrix(n_in, n_out):
    """align_corners=True bilinear interpolation matrix (n_out, n_in), static."""
    if n_in == 1:
        return jnp.ones((n_out, 1), jnp.float32)
    src = np.arange(n_out, dtype=np.float64) * (n_in - 1) / (n_out - 1)
    i0 = np.clip(np.floor(src).astype(np.int64), 0, n_in - 2)
    w1 = src - i0
    m = np.zeros((n_out, n_in), np.float32)
    m[np.arange(n_out), i0] += (1.0 - w1)
    m[np.arange(n_out), i0 + 1] += w1
    return jnp.asarray(m)


def _bilinear_up2x(x_nchw):
    """nn.Upsample(scale_factor=2, mode='bilinear', align_corners=True).

    Gather-free: two small dense interpolation matmuls with static weights.
    """
    N, C, H, W = x_nchw.shape
    uh = _interp_matrix(H, 2 * H)
    uw = _interp_matrix(W, 2 * W)
    y = jnp.einsum('ih,nchw->nciw', uh, x_nchw,
                   precision=jax.lax.Precision.HIGHEST)
    return jnp.einsum('nciw,jw->ncij', y, uw,
                      precision=jax.lax.Precision.HIGHEST)


def _merge_inputs(x1_nchw, x2_nchw):
    """upsample x1, pad to x2's spatial size, concat [x2, x1] on channels."""
    # TODO(synk): fold upsample+pad+concat into the conv-1 kernel (read x1/x2
    # directly) to avoid materializing the merged activation in HBM.
    x1u = _bilinear_up2x(x1_nchw)
    dy = x2_nchw.shape[2] - x1u.shape[2]
    dx = x2_nchw.shape[3] - x1u.shape[3]
    x1u = jnp.pad(x1u, ((0, 0), (0, 0),
                        (dy // 2, dy - dy // 2),
                        (dx // 2, dx - dx // 2)))
    return jnp.concatenate([x2_nchw, x1u], axis=1)


def _pad_flatten(x_nchw, pad):
    """(N,C,H,W) -> (N, C, H*W + 2*pad): zero-pad the flattened spatial axis."""
    N, C, H, W = x_nchw.shape
    return jnp.pad(x_nchw.reshape(N, C, H * W), ((0, 0), (0, 0), (pad, pad)))


def _bn_scale_shift(stats, gamma, beta, count):
    """Fold per-block [sum, sum-of-squares] into BN scale/shift (training stats)."""
    s = jnp.sum(stats[:, :, 0], axis=0)
    q = jnp.sum(stats[:, :, 1], axis=0)
    mean = s / count
    var = q / count - mean * mean          # biased variance, like torch BN norm
    scale = gamma / jnp.sqrt(var + EPS)
    shift = beta - mean * scale
    return scale.reshape(-1, 1), shift.reshape(-1, 1)


# ----------------------------------------------------------------------------
# Forward
# ----------------------------------------------------------------------------
def up_forward(x1_nchw, x2_nchw, params):
    """Forward of Up(in_channels, out_channels, bilinear=True). NCHW in/out."""
    x = _merge_inputs(x1_nchw, x2_nchw)          # (N, Cin, H, W) f32
    N, _, H, W = x.shape
    HW = H * W
    (w1, g1, b1), (w2, g2, b2) = params
    cin, cmid = w1.shape[1], w1.shape[2]
    cout = w2.shape[2]
    # Stacked-tap weight layout (Cout, 9*Cin) bf16: one MXU matmul per block
    # with contraction depth 9*Cin (row order = t*Cin + c, matching _stack_taps).
    w1k = jnp.transpose(w1, (2, 0, 1)).reshape(cmid, 9 * cin).astype(jnp.bfloat16)
    w2k = jnp.transpose(w2, (2, 0, 1)).reshape(cout, 9 * cmid).astype(jnp.bfloat16)

    pad = _lane_pad(W)
    x_flat = _pad_flatten(x, pad).astype(jnp.bfloat16)

    conv1, st1 = _conv_bn_stats(x_flat, w1k, H=H, W=W)
    scale1, shift1 = _bn_scale_shift(st1, g1, b1, N * HW)

    # TODO(synk): store conv1 as bf16 to halve inter-stage HBM traffic once the
    # bf16-rounded-before-BN numerics are validated against the f32 reference.
    conv2, st2 = _bnrelu_conv_bn_stats(conv1, scale1, shift1, w2k, H=H, W=W)
    scale2, shift2 = _bn_scale_shift(st2, g2, b2, N * HW)

    out = _bn_relu(conv2, scale2, shift2)        # (N, Cout, HW) f32
    return out.reshape(N, -1, H, W)


def init_params(key, in_channels, out_channels):
    """Deterministic synthetic weights. DoubleConv(in, out, mid=in//2)."""
    mid = in_channels // 2
    k1, k2 = jax.random.split(key)
    w1 = 0.1 * jax.random.normal(k1, (9, in_channels, mid), jnp.float32)
    w2 = 0.1 * jax.random.normal(k2, (9, mid, out_channels), jnp.float32)
    g1 = jnp.ones((mid,), jnp.float32)
    b1 = jnp.zeros((mid,), jnp.float32)
    g2 = jnp.ones((out_channels,), jnp.float32)
    b2 = jnp.zeros((out_channels,), jnp.float32)
    return [(w1, g1, b1), (w2, g2, b2)]


# ----------------------------------------------------------------------------
# Pure-JAX reference (lax.conv, bf16-rounded inputs to match MXU precision)
# ----------------------------------------------------------------------------
def _q(x):
    return x.astype(jnp.bfloat16).astype(jnp.float32)


def _double_conv_ref(x_nchw, params):
    y = x_nchw
    for (w, gamma, beta) in params:
        w4 = _q(w).reshape(3, 3, w.shape[1], w.shape[2])        # HWIO
        conv = jax.lax.conv_general_dilated(
            _q(y), w4, (1, 1), 'SAME',
            dimension_numbers=('NCHW', 'HWIO', 'NCHW'),
            precision=jax.lax.Precision.HIGHEST)
        m = conv.mean(axis=(0, 2, 3), keepdims=True)
        v = conv.var(axis=(0, 2, 3), keepdims=True)
        g = gamma.reshape(1, -1, 1, 1)
        b = beta.reshape(1, -1, 1, 1)
        y = jnp.maximum((conv - m) / jnp.sqrt(v + EPS) * g + b, 0.0)
    return y


def up_forward_ref(x1, x2, params):
    return _double_conv_ref(_merge_inputs(x1, x2), params)


if __name__ == "__main__":
    key = jax.random.PRNGKey(0)
    k_x1, k_x2, k_p = jax.random.split(key, 3)

    # x1 is the lower-res decoder feature, x2 the skip connection;
    # channels(x1) + channels(x2) == in_channels of DoubleConv.
    N, C1, H1, W1 = 2, 16, 8, 8       # x1: (2, 16, 8, 8)   NCHW
    C2, H2, W2 = 16, 16, 16           # x2: (2, 16, 16, 16) NCHW
    in_channels = C1 + C2             # 32
    out_channels = 32

    x1 = jax.random.normal(k_x1, (N, C1, H1, W1), jnp.float32)
    x2 = jax.random.normal(k_x2, (N, C2, H2, W2), jnp.float32)
    params = init_params(k_p, in_channels, out_channels)

    fwd = jax.jit(up_forward)
    out = fwd(x1, x2, params)
    jax.block_until_ready(out)

    ref = up_forward_ref(x1, x2, params)
    assert out.shape == (N, out_channels, H2, W2), out.shape
    max_err = float(jnp.max(jnp.abs(out - ref)))
    assert jnp.allclose(out, ref, atol=1e-2, rtol=1e-2), max_err
    print("KERNEL_OK")
</pallas_src>

<mosaic_0001>
module attributes {stable_mosaic.version = 11 : i64} {
  func.func @_conv_stats_kernel(%arg0: i32, %arg1: memref<1x32x512xbf16, #tpu.memory_space<vmem>>, %arg2: memref<16x288xbf16, #tpu.memory_space<vmem>>, %arg3: memref<1x16x256xf32, #tpu.memory_space<vmem>>, %arg4: memref<1x16x2xf32, #tpu.memory_space<vmem>>, %arg5: memref<288x256xbf16, #tpu.memory_space<vmem>>) attributes {dimension_semantics = [#tpu.dimension_semantics<parallel>], iteration_bounds = array<i64: 2>, scalar_prefetch = 0 : i64, scratch_operands = 1 : i64, tpu.core_type = #tpu.core_type<tc>, window_params = [{transform_indices = @transform_0, window_bounds = array<i64: 1, 32, 512>}, {pipeline_mode = #tpu.pipeline_mode<synchronous>, transform_indices = @transform_1, window_bounds = array<i64: 16, 288>}, {transform_indices = @transform_2, window_bounds = array<i64: 1, 16, 256>}, {transform_indices = @transform_3, window_bounds = array<i64: 1, 16, 2>}]} {
    %0 = tpu.iota {dimensions = array<i32: 1>} : vector<1x256xi32>
    %c16_i32 = arith.constant 16 : i32
    %c0_i32 = arith.constant 0 : i32
    %1 = arith.cmpi eq, %c16_i32, %c0_i32 : i32
    %c1_i32 = arith.constant 1 : i32
    %2 = arith.select %1, %c1_i32, %c16_i32 : i32
    %3 = vector.broadcast %2 : i32 to vector<1x256xi32>
    %4 = arith.remsi %0, %3 : vector<1x256xi32>
    %c0_i32_0 = arith.constant 0 : i32
    %5 = vector.broadcast %c0_i32_0 : i32 to vector<1x256xi32>
    %6 = arith.cmpi ne, %4, %5 : vector<1x256xi32>
    %c0_i32_1 = arith.constant 0 : i32
    %7 = vector.broadcast %c0_i32_1 : i32 to vector<1x256xi32>
    %8 = arith.cmpi slt, %4, %7 : vector<1x256xi32>
    %c0_i32_2 = arith.constant 0 : i32
    %9 = arith.cmpi slt, %2, %c0_i32_2 : i32
    %10 = vector.broadcast %9 : i1 to vector<1x256xi1>
    %11 = vector.broadcast %10 : vector<1x256xi1> to vector<1x256xi1>
    %12 = arith.xori %8, %11 : vector<1x256xi1>
    %13 = arith.andi %12, %6 : vector<1x256xi1>
    %14 = vector.broadcast %2 : i32 to vector<1x256xi32>
    %15 = arith.addi %4, %14 : vector<1x256xi32>
    %16 = arith.select %13, %15, %4 : vector<1x256xi1>, vector<1x256xi32>
    %c0_i32_3 = arith.constant 0 : i32
    %17 = vector.broadcast %c0_i32_3 : i32 to vector<1x256xi32>
    %18 = arith.cmpi ne, %16, %17 : vector<1x256xi32>
    %c15_i32 = arith.constant 15 : i32
    %19 = vector.broadcast %c15_i32 : i32 to vector<1x256xi32>
    %20 = arith.cmpi ne, %16, %19 : vector<1x256xi32>
    %cst = arith.constant 0.000000e+00 : bf16
    %21 = vector.broadcast %cst : bf16 to vector<1x256xbf16>
    %c0 = arith.constant 0 : index
    %c0_4 = arith.constant 0 : index
    %c111 = arith.constant 111 : index
    %22 = vector.load %arg1[%c0, %c0_4, %c111] : memref<1x32x512xbf16, #tpu.memory_space<vmem>>, vector<1x32x256xbf16>
    %23 = vector.shape_cast %22 : vector<1x32x256xbf16> to vector<32x256xbf16>
    %24 = vector.shape_cast %18 : vector<1x256xi1> to vector<1x256xi1>
    %25 = vector.broadcast %24 : vector<1x256xi1> to vector<32x256xi1>
    %26 = vector.shape_cast %21 : vector<1x256xbf16> to vector<1x256xbf16>
    %27 = vector.broadcast %26 : vector<1x256xbf16> to vector<32x256xbf16>
    %28 = arith.select %25, %23, %27 : vector<32x256xi1>, vector<32x256xbf16>
    %c0_5 = arith.constant 0 : index
    %c0_6 = arith.constant 0 : index
    %29 = vector.load %arg5[%c0_5, %c0_6] : memref<288x256xbf16, #tpu.memory_space<vmem>>, vector<32x256xbf16>
    tpu.vector_store %arg5[%c0_5, %c0_6], %28 {strides = array<i32>} : memref<288x256xbf16, #tpu.memory_space<vmem>>, vector<32x256xbf16>,
    %c0_7 = arith.constant 0 : index
    %c0_8 = arith.constant 0 : index
    %c112 = arith.constant 112 : index
    %30 = vector.load %arg1[%c0_7, %c0_8, %c112] : memref<1x32x512xbf16, #tpu.memory_space<vmem>>, vector<1x32x256xbf16>
    %31 = vector.shape_cast %30 : vector<1x32x256xbf16> to vector<32x256xbf16>
    %c32 = arith.constant 32 : index
    %c0_9 = arith.constant 0 : index
    %32 = vector.load %arg5[%c32, %c0_9] : memref<288x256xbf16, #tpu.memory_space<vmem>>, vector<32x256xbf16>
    tpu.vector_store %arg5[%c32, %c0_9], %31 {strides = array<i32>} : memref<288x256xbf16, #tpu.memory_space<vmem>>, vector<32x256xbf16>,
    %c0_10 = arith.constant 0 : index
    %c0_11 = arith.constant 0 : index
    %c113 = arith.constant 113 : index
    %33 = vector.load %arg1[%c0_10, %c0_11, %c113] : memref<1x32x512xbf16, #tpu.memory_space<vmem>>, vector<1x32x256xbf16>
    %34 = vector.shape_cast %33 : vector<1x32x256xbf16> to vector<32x256xbf16>
    %35 = vector.shape_cast %20 : vector<1x256xi1> to vector<1x256xi1>
    %36 = vector.broadcast %35 : vector<1x256xi1> to vector<32x256xi1>
    %37 = vector.shape_cast %21 : vector<1x256xbf16> to vector<1x256xbf16>
    %38 = vector.broadcast %37 : vector<1x256xbf16> to vector<32x256xbf16>
    %39 = arith.select %36, %34, %38 : vector<32x256xi1>, vector<32x256xbf16>
    %c64 = arith.constant 64 : index
    %c0_12 = arith.constant 0 : index
    %40 = vector.load %arg5[%c64, %c0_12] : memref<288x256xbf16, #tpu.memory_space<vmem>>, vector<32x256xbf16>
    tpu.vector_store %arg5[%c64, %c0_12], %39 {strides = array<i32>} : memref<288x256xbf16, #tpu.memory_space<vmem>>, vector<32x256xbf16>,
    %c0_13 = arith.constant 0 : index
    %c0_14 = arith.constant 0 : index
    %c127 = arith.constant 127 : index
    %41 = vector.load %arg1[%c0_13, %c0_14, %c127] : memref<1x32x512xbf16, #tpu.memory_space<vmem>>, vector<1x32x256xbf16>
    %42 = vector.shape_cast %41 : vector<1x32x256xbf16> to vector<32x256xbf16>
    %43 = vector.shape_cast %18 : vector<1x256xi1> to vector<1x256xi1>
    %44 = vector.broadcast %43 : vector<1x256xi1> to vector<32x256xi1>
    %45 = vector.shape_cast %21 : vector<1x256xbf16> to vector<1x256xbf16>
    %46 = vector.broadcast %45 : vector<1x256xbf16> to vector<32x256xbf16>
    %47 = arith.select %44, %42, %46 : vector<32x256xi1>, vector<32x256xbf16>
    %c96 = arith.constant 96 : index
    %c0_15 = arith.constant 0 : index
    %48 = vector.load %arg5[%c96, %c0_15] : memref<288x256xbf16, #tpu.memory_space<vmem>>, vector<32x256xbf16>
    tpu.vector_store %arg5[%c96, %c0_15], %47 {strides = array<i32>} : memref<288x256xbf16, #tpu.memory_space<vmem>>, vector<32x256xbf16>,
    %c0_16 = arith.constant 0 : index
    %c0_17 = arith.constant 0 : index
    %c128 = arith.constant 128 : index
    %49 = vector.load %arg1[%c0_16, %c0_17, %c128] : memref<1x32x512xbf16, #tpu.memory_space<vmem>>, vector<1x32x256xbf16>
    %50 = vector.shape_cast %49 : vector<1x32x256xbf16> to vector<32x256xbf16>
    %c128_18 = arith.constant 128 : index
    %c0_19 = arith.constant 0 : index
    %51 = vector.load %arg5[%c128_18, %c0_19] : memref<288x256xbf16, #tpu.memory_space<vmem>>, vector<32x256xbf16>
    tpu.vector_store %arg5[%c128_18, %c0_19], %50 {strides = array<i32>} : memref<288x256xbf16, #tpu.memory_space<vmem>>, vector<32x256xbf16>,
    %c0_20 = arith.constant 0 : index
    %c0_21 = arith.constant 0 : index
    %c129 = arith.constant 129 : index
    %52 = vector.load %arg1[%c0_20, %c0_21, %c129] : memref<1x32x512xbf16, #tpu.memory_space<vmem>>, vector<1x32x256xbf16>
    %53 = vector.shape_cast %52 : vector<1x32x256xbf16> to vector<32x256xbf16>
    %54 = vector.shape_cast %20 : vector<1x256xi1> to vector<1x256xi1>
    %55 = vector.broadcast %54 : vector<1x256xi1> to vector<32x256xi1>
    %56 = vector.shape_cast %21 : vector<1x256xbf16> to vector<1x256xbf16>
    %57 = vector.broadcast %56 : vector<1x256xbf16> to vector<32x256xbf16>
    %58 = arith.select %55, %53, %57 : vector<32x256xi1>, vector<32x256xbf16>
    %c160 = arith.constant 160 : index
    %c0_22 = arith.constant 0 : index
    %59 = vector.load %arg5[%c160, %c0_22] : memref<288x256xbf16, #tpu.memory_space<vmem>>, vector<32x256xbf16>
    tpu.vector_store %arg5[%c160, %c0_22], %58 {strides = array<i32>} : memref<288x256xbf16, #tpu.memory_space<vmem>>, vector<32x256xbf16>,
    %c0_23 = arith.constant 0 : index
    %c0_24 = arith.constant 0 : index
    %c143 = arith.constant 143 : index
    %60 = vector.load %arg1[%c0_23, %c0_24, %c143] : memref<1x32x512xbf16, #tpu.memory_space<vmem>>, vector<1x32x256xbf16>
    %61 = vector.shape_cast %60 : vector<1x32x256xbf16> to vector<32x256xbf16>
    %62 = vector.shape_cast %18 : vector<1x256xi1> to vector<1x256xi1>
    %63 = vector.broadcast %62 : vector<1x256xi1> to vector<32x256xi1>
    %64 = vector.shape_cast %21 : vector<1x256xbf16> to vector<1x256xbf16>
    %65 = vector.broadcast %64 : vector<1x256xbf16> to vector<32x256xbf16>
    %66 = arith.select %63, %61, %65 : vector<32x256xi1>, vector<32x256xbf16>
    %c192 = arith.constant 192 : index
    %c0_25 = arith.constant 0 : index
    %67 = vector.load %arg5[%c192, %c0_25] : memref<288x256xbf16, #tpu.memory_space<vmem>>, vector<32x256xbf16>
    tpu.vector_store %arg5[%c192, %c0_25], %66 {strides = array<i32>} : memref<288x256xbf16, #tpu.memory_space<vmem>>, vector<32x256xbf16>,
    %c0_26 = arith.constant 0 : index
    %c0_27 = arith.constant 0 : index
    %c144 = arith.constant 144 : index
    %68 = vector.load %arg1[%c0_26, %c0_27, %c144] : memref<1x32x512xbf16, #tpu.memory_space<vmem>>, vector<1x32x256xbf16>
    %69 = vector.shape_cast %68 : vector<1x32x256xbf16> to vector<32x256xbf16>
    %c224 = arith.constant 224 : index
    %c0_28 = arith.constant 0 : index
    %70 = vector.load %arg5[%c224, %c0_28] : memref<288x256xbf16, #tpu.memory_space<vmem>>, vector<32x256xbf16>
    tpu.vector_store %arg5[%c224, %c0_28], %69 {strides = array<i32>} : memref<288x256xbf16, #tpu.memory_space<vmem>>, vector<32x256xbf16>,
    %c0_29 = arith.constant 0 : index
    %c0_30 = arith.constant 0 : index
    %c145 = arith.constant 145 : index
    %71 = vector.load %arg1[%c0_29, %c0_30, %c145] : memref<1x32x512xbf16, #tpu.memory_space<vmem>>, vector<1x32x256xbf16>
    %72 = vector.shape_cast %71 : vector<1x32x256xbf16> to vector<32x256xbf16>
    %73 = vector.shape_cast %20 : vector<1x256xi1> to vector<1x256xi1>
    %74 = vector.broadcast %73 : vector<1x256xi1> to vector<32x256xi1>
    %75 = vector.shape_cast %21 : vector<1x256xbf16> to vector<1x256xbf16>
    %76 = vector.broadcast %75 : vector<1x256xbf16> to vector<32x256xbf16>
    %77 = arith.select %74, %72, %76 : vector<32x256xi1>, vector<32x256xbf16>
    %c256 = arith.constant 256 : index
    %c0_31 = arith.constant 0 : index
    %78 = vector.load %arg5[%c256, %c0_31] : memref<288x256xbf16, #tpu.memory_space<vmem>>, vector<32x256xbf16>
    tpu.vector_store %arg5[%c256, %c0_31], %77 {strides = array<i32>} : memref<288x256xbf16, #tpu.memory_space<vmem>>, vector<32x256xbf16>,
    %c0_32 = arith.constant 0 : index
    %c0_33 = arith.constant 0 : index
    %79 = vector.load %arg2[%c0_32, %c0_33] : memref<16x288xbf16, #tpu.memory_space<vmem>>, vector<16x288xbf16>
    %c0_34 = arith.constant 0 : index
    %c0_35 = arith.constant 0 : index
    %80 = vector.load %arg5[%c0_34, %c0_35] : memref<288x256xbf16, #tpu.memory_space<vmem>>, vector<288x256xbf16>
    %cst_36 = arith.constant dense<0.000000e+00> : vector<16x256xf32>
    %81 = tpu.matmul %79, %80, %cst_36 {dimension_numbers = #tpu.dot_dimension_numbers<[1], [0], [0], [1], [0, 0, 1, 1], [], []>} : vector<16x288xbf16>, vector<288x256xbf16>, vector<16x256xf32> -> vector<16x256xf32>
    %c0_37 = arith.constant 0 : index
    %c0_38 = arith.constant 0 : index
    %c0_39 = arith.constant 0 : index
    %82 = vector.load %arg3[%c0_37, %c0_38, %c0_39] : memref<1x16x256xf32, #tpu.memory_space<vmem>>, vector<1x16x256xf32>
    %83 = vector.shape_cast %82 : vector<1x16x256xf32> to vector<16x256xf32>
    %84 = vector.shape_cast %81 : vector<16x256xf32> to vector<1x16x256xf32>
    tpu.vector_store %arg3[%c0_37, %c0_38, %c0_39], %84 {strides = array<i32>} : memref<1x16x256xf32, #tpu.memory_space<vmem>>, vector<1x16x256xf32>,
    %cst_40 = arith.constant dense<0.000000e+00> : vector<16xf32>
    %85 = vector.multi_reduction <add>, %81, %cst_40 [1] : vector<16x256xf32> to vector<16xf32>
    %86 = vector.shape_cast %85 : vector<16xf32> to vector<16x1xf32>
    %c0_41 = arith.constant 0 : index
    %c0_42 = arith.constant 0 : index
    %c0_43 = arith.constant 0 : index
    %87 = vector.load %arg4[%c0_41, %c0_42, %c0_43] : memref<1x16x2xf32, #tpu.memory_space<vmem>>, vector<1x16x1xf32>
    %88 = vector.shape_cast %87 : vector<1x16x1xf32> to vector<16x1xf32>
    %89 = vector.shape_cast %86 : vector<16x1xf32> to vector<1x16x1xf32>
    tpu.vector_store %arg4[%c0_41, %c0_42, %c0_43], %89 {strides = array<i32>} : memref<1x16x2xf32, #tpu.memory_space<vmem>>, vector<1x16x1xf32>,
    %90 = arith.mulf %81, %81 : vector<16x256xf32>
    %cst_44 = arith.constant dense<0.000000e+00> : vector<16xf32>
    %91 = vector.multi_reduction <add>, %90, %cst_44 [1] : vector<16x256xf32> to vector<16xf32>
    %92 = vector.shape_cast %91 : vector<16xf32> to vector<16x1xf32>
    %c0_45 = arith.constant 0 : index
    %c0_46 = arith.constant 0 : index
    %c1 = arith.constant 1 : index
    %93 = vector.load %arg4[%c0_45, %c0_46, %c1] : memref<1x16x2xf32, #tpu.memory_space<vmem>>, vector<1x16x1xf32>
    %94 = vector.shape_cast %93 : vector<1x16x1xf32> to vector<16x1xf32>
    %95 = vector.shape_cast %92 : vector<16x1xf32> to vector<1x16x1xf32>
    tpu.vector_store %arg4[%c0_45, %c0_46, %c1], %95 {strides = array<i32>} : memref<1x16x2xf32, #tpu.memory_space<vmem>>, vector<1x16x1xf32>,
    return
  }
  func.func @transform_0(%arg0: i32) -> (i32, i32, i32) {
    %c0_i32 = arith.constant 0 : i32
    %c0_i32_0 = arith.constant 0 : i32
    %c0_i32_1 = arith.constant 0 : i32
    return %arg0, %c0_i32, %c0_i32_0 : i32, i32, i32
  }
  func.func @transform_1(%arg0: i32) -> (i32, i32) {
    %c0_i32 = arith.constant 0 : i32
    %c0_i32_0 = arith.constant 0 : i32
    %c0_i32_1 = arith.constant 0 : i32
    return %c0_i32, %c0_i32_0 : i32, i32
  }
  func.func @transform_2(%arg0: i32) -> (i32, i32, i32) {
    %c0_i32 = arith.constant 0 : i32
    %c0_i32_0 = arith.constant 0 : i32
    %c0_i32_1 = arith.constant 0 : i32
    return %arg0, %c0_i32, %c0_i32_0 : i32, i32, i32
  }
  func.func @transform_3(%arg0: i32) -> (i32, i32, i32) {
    %c0_i32 = arith.constant 0 : i32
    %c0_i32_0 = arith.constant 0 : i32
    %c0_i32_1 = arith.constant 0 : i32
    return %arg0, %c0_i32, %c0_i32_0 : i32, i32, i32
  }
}

module attributes {stable_mosaic.version = 11 : i64} {
  func.func @_bnrelu_conv_stats_kernel(%arg0: i32, %arg1: memref<1x16x256xf32, #tpu.memory_space<vmem>>, %arg2: memref<16x1xf32, #tpu.memory_space<vmem>>, %arg3: memref<16x1xf32, #tpu.memory_space<vmem>>, %arg4: memref<32x144xbf16, #tpu.memory_space<vmem>>, %arg5: memref<1x32x256xf32, #tpu.memory_space<vmem>>, %arg6: memref<1x32x2xf32, #tpu.memory_space<vmem>>, %arg7: memref<16x512xbf16, #tpu.memory_space<vmem>>, %arg8: memref<144x256xbf16, #tpu.memory_space<vmem>>) attributes {dimension_semantics = [#tpu.dimension_semantics<parallel>], iteration_bounds = array<i64: 2>, scalar_prefetch = 0 : i64, scratch_operands = 2 : i64, tpu.core_type = #tpu.core_type<tc>, window_params = [{transform_indices = @transform_0, window_bounds = array<i64: 1, 16, 256>}, {pipeline_mode = #tpu.pipeline_mode<synchronous>, transform_indices = @transform_1, window_bounds = array<i64: 16, 1>}, {pipeline_mode = #tpu.pipeline_mode<synchronous>, transform_indices = @transform_2, window_bounds = array<i64: 16, 1>}, {pipeline_mode = #tpu.pipeline_mode<synchronous>, transform_indices = @transform_3, window_bounds = array<i64: 32, 144>}, {transform_indices = @transform_4, window_bounds = array<i64: 1, 32, 256>}, {transform_indices = @transform_5, window_bounds = array<i64: 1, 32, 2>}]} {
    %c0 = arith.constant 0 : index
    %c0_0 = arith.constant 0 : index
    %c0_1 = arith.constant 0 : index
    %0 = vector.load %arg1[%c0, %c0_0, %c0_1] : memref<1x16x256xf32, #tpu.memory_space<vmem>>, vector<1x16x256xf32>
    %1 = vector.shape_cast %0 : vector<1x16x256xf32> to vector<16x256xf32>
    %c0_2 = arith.constant 0 : index
    %c0_3 = arith.constant 0 : index
    %2 = vector.load %arg2[%c0_2, %c0_3] : memref<16x1xf32, #tpu.memory_space<vmem>>, vector<16x1xf32>
    %3 = vector.broadcast %2 : vector<16x1xf32> to vector<16x256xf32>
    %4 = arith.mulf %1, %3 : vector<16x256xf32>
    %c0_4 = arith.constant 0 : index
    %c0_5 = arith.constant 0 : index
    %5 = vector.load %arg3[%c0_4, %c0_5] : memref<16x1xf32, #tpu.memory_space<vmem>>, vector<16x1xf32>
    %6 = vector.broadcast %5 : vector<16x1xf32> to vector<16x256xf32>
    %7 = arith.addf %4, %6 : vector<16x256xf32>
    %cst = arith.constant 0.000000e+00 : f32
    %8 = vector.broadcast %cst : f32 to vector<16x256xf32>
    %9 = arith.maximumf %7, %8 : vector<16x256xf32>
    %cst_6 = arith.constant 0.000000e+00 : bf16
    %10 = vector.broadcast %cst_6 : bf16 to vector<16x128xbf16>
    %c0_7 = arith.constant 0 : index
    %c0_8 = arith.constant 0 : index
    %11 = vector.load %arg7[%c0_7, %c0_8] : memref<16x512xbf16, #tpu.memory_space<vmem>>, vector<16x128xbf16>
    tpu.vector_store %arg7[%c0_7, %c0_8], %10 {strides = array<i32>} : memref<16x512xbf16, #tpu.memory_space<vmem>>, vector<16x128xbf16>,
    %cst_9 = arith.constant 0.000000e+00 : bf16
    %12 = vector.broadcast %cst_9 : bf16 to vector<16x128xbf16>
    %c0_10 = arith.constant 0 : index
    %c384 = arith.constant 384 : index
    %13 = vector.load %arg7[%c0_10, %c384] : memref<16x512xbf16, #tpu.memory_space<vmem>>, vector<16x128xbf16>
    tpu.vector_store %arg7[%c0_10, %c384], %12 {strides = array<i32>} : memref<16x512xbf16, #tpu.memory_space<vmem>>, vector<16x128xbf16>,
    %14 = arith.truncf %9 : vector<16x256xf32> to vector<16x256xbf16>
    %c0_11 = arith.constant 0 : index
    %c128 = arith.constant 128 : index
    %15 = vector.load %arg7[%c0_11, %c128] : memref<16x512xbf16, #tpu.memory_space<vmem>>, vector<16x256xbf16>
    tpu.vector_store %arg7[%c0_11, %c128], %14 {strides = array<i32>} : memref<16x512xbf16, #tpu.memory_space<vmem>>, vector<16x256xbf16>,
    %16 = tpu.iota {dimensions = array<i32: 1>} : vector<1x256xi32>
    %c16_i32 = arith.constant 16 : i32
    %c0_i32 = arith.constant 0 : i32
    %17 = arith.cmpi eq, %c16_i32, %c0_i32 : i32
    %c1_i32 = arith.constant 1 : i32
    %18 = arith.select %17, %c1_i32, %c16_i32 : i32
    %19 = vector.broadcast %18 : i32 to vector<1x256xi32>
    %20 = arith.remsi %16, %19 : vector<1x256xi32>
    %c0_i32_12 = arith.constant 0 : i32
    %21 = vector.broadcast %c0_i32_12 : i32 to vector<1x256xi32>
    %22 = arith.cmpi ne, %20, %21 : vector<1x256xi32>
    %c0_i32_13 = arith.constant 0 : i32
    %23 = vector.broadcast %c0_i32_13 : i32 to vector<1x256xi32>
    %24 = arith.cmpi slt, %20, %23 : vector<1x256xi32>
    %c0_i32_14 = arith.constant 0 : i32
    %25 = arith.cmpi slt, %18, %c0_i32_14 : i32
    %26 = vector.broadcast %25 : i1 to vector<1x256xi1>
    %27 = vector.broadcast %26 : vector<1x256xi1> to vector<1x256xi1>
    %28 = arith.xori %24, %27 : vector<1x256xi1>
    %29 = arith.andi %28, %22 : vector<1x256xi1>
    %30 = vector.broadcast %18 : i32 to vector<1x256xi32>
    %31 = arith.addi %20, %30 : vector<1x256xi32>
    %32 = arith.select %29, %31, %20 : vector<1x256xi1>, vector<1x256xi32>
    %c0_i32_15 = arith.constant 0 : i32
    %33 = vector.broadcast %c0_i32_15 : i32 to vector<1x256xi32>
    %34 = arith.cmpi ne, %32, %33 : vector<1x256xi32>
    %c15_i32 = arith.constant 15 : i32
    %35 = vector.broadcast %c15_i32 : i32 to vector<1x256xi32>
    %36 = arith.cmpi ne, %32, %35 : vector<1x256xi32>
    %cst_16 = arith.constant 0.000000e+00 : bf16
    %37 = vector.broadcast %cst_16 : bf16 to vector<1x256xbf16>
    %c0_17 = arith.constant 0 : index
    %c111 = arith.constant 111 : index
    %38 = vector.load %arg7[%c0_17, %c111] : memref<16x512xbf16, #tpu.memory_space<vmem>>, vector<16x256xbf16>
    %39 = vector.shape_cast %34 : vector<1x256xi1> to vector<1x256xi1>
    %40 = vector.broadcast %39 : vector<1x256xi1> to vector<16x256xi1>
    %41 = vector.shape_cast %37 : vector<1x256xbf16> to vector<1x256xbf16>
    %42 = vector.broadcast %41 : vector<1x256xbf16> to vector<16x256xbf16>
    %43 = arith.select %40, %38, %42 : vector<16x256xi1>, vector<16x256xbf16>
    %c0_18 = arith.constant 0 : index
    %c0_19 = arith.constant 0 : index
    %44 = vector.load %arg8[%c0_18, %c0_19] : memref<144x256xbf16, #tpu.memory_space<vmem>>, vector<16x256xbf16>
    tpu.vector_store %arg8[%c0_18, %c0_19], %43 {strides = array<i32>} : memref<144x256xbf16, #tpu.memory_space<vmem>>, vector<16x256xbf16>,
    %c0_20 = arith.constant 0 : index
    %c112 = arith.constant 112 : index
    %45 = vector.load %arg7[%c0_20, %c112] : memref<16x512xbf16, #tpu.memory_space<vmem>>, vector<16x256xbf16>
    %c16 = arith.constant 16 : index
    %c0_21 = arith.constant 0 : index
    %46 = vector.load %arg8[%c16, %c0_21] : memref<144x256xbf16, #tpu.memory_space<vmem>>, vector<16x256xbf16>
    tpu.vector_store %arg8[%c16, %c0_21], %45 {strides = array<i32>} : memref<144x256xbf16, #tpu.memory_space<vmem>>, vector<16x256xbf16>,
    %c0_22 = arith.constant 0 : index
    %c113 = arith.constant 113 : index
    %47 = vector.load %arg7[%c0_22, %c113] : memref<16x512xbf16, #tpu.memory_space<vmem>>, vector<16x256xbf16>
    %48 = vector.shape_cast %36 : vector<1x256xi1> to vector<1x256xi1>
    %49 = vector.broadcast %48 : vector<1x256xi1> to vector<16x256xi1>
    %50 = vector.shape_cast %37 : vector<1x256xbf16> to vector<1x256xbf16>
    %51 = vector.broadcast %50 : vector<1x256xbf16> to vector<16x256xbf16>
    %52 = arith.select %49, %47, %51 : vector<16x256xi1>, vector<16x256xbf16>
    %c32 = arith.constant 32 : index
    %c0_23 = arith.constant 0 : index
    %53 = vector.load %arg8[%c32, %c0_23] : memref<144x256xbf16, #tpu.memory_space<vmem>>, vector<16x256xbf16>
    tpu.vector_store %arg8[%c32, %c0_23], %52 {strides = array<i32>} : memref<144x256xbf16, #tpu.memory_space<vmem>>, vector<16x256xbf16>,
    %c0_24 = arith.constant 0 : index
    %c127 = arith.constant 127 : index
    %54 = vector.load %arg7[%c0_24, %c127] : memref<16x512xbf16, #tpu.memory_space<vmem>>, vector<16x256xbf16>
    %55 = vector.shape_cast %34 : vector<1x256xi1> to vector<1x256xi1>
    %56 = vector.broadcast %55 : vector<1x256xi1> to vector<16x256xi1>
    %57 = vector.shape_cast %37 : vector<1x256xbf16> to vector<1x256xbf16>
    %58 = vector.broadcast %57 : vector<1x256xbf16> to vector<16x256xbf16>
    %59 = arith.select %56, %54, %58 : vector<16x256xi1>, vector<16x256xbf16>
    %c48 = arith.constant 48 : index
    %c0_25 = arith.constant 0 : index
    %60 = vector.load %arg8[%c48, %c0_25] : memref<144x256xbf16, #tpu.memory_space<vmem>>, vector<16x256xbf16>
    tpu.vector_store %arg8[%c48, %c0_25], %59 {strides = array<i32>} : memref<144x256xbf16, #tpu.memory_space<vmem>>, vector<16x256xbf16>,
    %c0_26 = arith.constant 0 : index
    %c128_27 = arith.constant 128 : index
    %61 = vector.load %arg7[%c0_26, %c128_27] : memref<16x512xbf16, #tpu.memory_space<vmem>>, vector<16x256xbf16>
    %c64 = arith.constant 64 : index
    %c0_28 = arith.constant 0 : index
    %62 = vector.load %arg8[%c64, %c0_28] : memref<144x256xbf16, #tpu.memory_space<vmem>>, vector<16x256xbf16>
    tpu.vector_store %arg8[%c64, %c0_28], %61 {strides = array<i32>} : memref<144x256xbf16, #tpu.memory_space<vmem>>, vector<16x256xbf16>,
    %c0_29 = arith.constant 0 : index
    %c129 = arith.constant 129 : index
    %63 = vector.load %arg7[%c0_29, %c129] : memref<16x512xbf16, #tpu.memory_space<vmem>>, vector<16x256xbf16>
    %64 = vector.shape_cast %36 : vector<1x256xi1> to vector<1x256xi1>
    %65 = vector.broadcast %64 : vector<1x256xi1> to vector<16x256xi1>
    %66 = vector.shape_cast %37 : vector<1x256xbf16> to vector<1x256xbf16>
    %67 = vector.broadcast %66 : vector<1x256xbf16> to vector<16x256xbf16>
    %68 = arith.select %65, %63, %67 : vector<16x256xi1>, vector<16x256xbf16>
    %c80 = arith.constant 80 : index
    %c0_30 = arith.constant 0 : index
    %69 = vector.load %arg8[%c80, %c0_30] : memref<144x256xbf16, #tpu.memory_space<vmem>>, vector<16x256xbf16>
    tpu.vector_store %arg8[%c80, %c0_30], %68 {strides = array<i32>} : memref<144x256xbf16, #tpu.memory_space<vmem>>, vector<16x256xbf16>,
    %c0_31 = arith.constant 0 : index
    %c143 = arith.constant 143 : index
    %70 = vector.load %arg7[%c0_31, %c143] : memref<16x512xbf16, #tpu.memory_space<vmem>>, vector<16x256xbf16>
    %71 = vector.shape_cast %34 : vector<1x256xi1> to vector<1x256xi1>
    %72 = vector.broadcast %71 : vector<1x256xi1> to vector<16x256xi1>
    %73 = vector.shape_cast %37 : vector<1x256xbf16> to vector<1x256xbf16>
    %74 = vector.broadcast %73 : vector<1x256xbf16> to vector<16x256xbf16>
    %75 = arith.select %72, %70, %74 : vector<16x256xi1>, vector<16x256xbf16>
    %c96 = arith.constant 96 : index
    %c0_32 = arith.constant 0 : index
    %76 = vector.load %arg8[%c96, %c0_32] : memref<144x256xbf16, #tpu.memory_space<vmem>>, vector<16x256xbf16>
    tpu.vector_store %arg8[%c96, %c0_32], %75 {strides = array<i32>} : memref<144x256xbf16, #tpu.memory_space<vmem>>, vector<16x256xbf16>,
    %c0_33 = arith.constant 0 : index
    %c144 = arith.constant 144 : index
    %77 = vector.load %arg7[%c0_33, %c144] : memref<16x512xbf16, #tpu.memory_space<vmem>>, vector<16x256xbf16>
    %c112_34 = arith.constant 112 : index
    %c0_35 = arith.constant 0 : index
    %78 = vector.load %arg8[%c112_34, %c0_35] : memref<144x256xbf16, #tpu.memory_space<vmem>>, vector<16x256xbf16>
    tpu.vector_store %arg8[%c112_34, %c0_35], %77 {strides = array<i32>} : memref<144x256xbf16, #tpu.memory_space<vmem>>, vector<16x256xbf16>,
    %c0_36 = arith.constant 0 : index
    %c145 = arith.constant 145 : index
    %79 = vector.load %arg7[%c0_36, %c145] : memref<16x512xbf16, #tpu.memory_space<vmem>>, vector<16x256xbf16>
    %80 = vector.shape_cast %36 : vector<1x256xi1> to vector<1x256xi1>
    %81 = vector.broadcast %80 : vector<1x256xi1> to vector<16x256xi1>
    %82 = vector.shape_cast %37 : vector<1x256xbf16> to vector<1x256xbf16>
    %83 = vector.broadcast %82 : vector<1x256xbf16> to vector<16x256xbf16>
    %84 = arith.select %81, %79, %83 : vector<16x256xi1>, vector<16x256xbf16>
    %c128_37 = arith.constant 128 : index
    %c0_38 = arith.constant 0 : index
    %85 = vector.load %arg8[%c128_37, %c0_38] : memref<144x256xbf16, #tpu.memory_space<vmem>>, vector<16x256xbf16>
    tpu.vector_store %arg8[%c128_37, %c0_38], %84 {strides = array<i32>} : memref<144x256xbf16, #tpu.memory_space<vmem>>, vector<16x256xbf16>,
    %c0_39 = arith.constant 0 : index
    %c0_40 = arith.constant 0 : index
    %86 = vector.load %arg4[%c0_39, %c0_40] : memref<32x144xbf16, #tpu.memory_space<vmem>>, vector<32x144xbf16>
    %c0_41 = arith.constant 0 : index
    %c0_42 = arith.constant 0 : index
    %87 = vector.load %arg8[%c0_41, %c0_42] : memref<144x256xbf16, #tpu.memory_space<vmem>>, vector<144x256xbf16>
    %cst_43 = arith.constant dense<0.000000e+00> : vector<32x256xf32>
    %88 = tpu.matmul %86, %87, %cst_43 {dimension_numbers = #tpu.dot_dimension_numbers<[1], [0], [0], [1], [0, 0, 1, 1], [], []>} : vector<32x144xbf16>, vector<144x256xbf16>, vector<32x256xf32> -> vector<32x256xf32>
    %c0_44 = arith.constant 0 : index
    %c0_45 = arith.constant 0 : index
    %c0_46 = arith.constant 0 : index
    %89 = vector.load %arg5[%c0_44, %c0_45, %c0_46] : memref<1x32x256xf32, #tpu.memory_space<vmem>>, vector<1x32x256xf32>
    %90 = vector.shape_cast %89 : vector<1x32x256xf32> to vector<32x256xf32>
    %91 = vector.shape_cast %88 : vector<32x256xf32> to vector<1x32x256xf32>
    tpu.vector_store %arg5[%c0_44, %c0_45, %c0_46], %91 {strides = array<i32>} : memref<1x32x256xf32, #tpu.memory_space<vmem>>, vector<1x32x256xf32>,
    %cst_47 = arith.constant dense<0.000000e+00> : vector<32xf32>
    %92 = vector.multi_reduction <add>, %88, %cst_47 [1] : vector<32x256xf32> to vector<32xf32>
    %93 = vector.shape_cast %92 : vector<32xf32> to vector<32x1xf32>
    %c0_48 = arith.constant 0 : index
    %c0_49 = arith.constant 0 : index
    %c0_50 = arith.constant 0 : index
    %94 = vector.load %arg6[%c0_48, %c0_49, %c0_50] : memref<1x32x2xf32, #tpu.memory_space<vmem>>, vector<1x32x1xf32>
    %95 = vector.shape_cast %94 : vector<1x32x1xf32> to vector<32x1xf32>
    %96 = vector.shape_cast %93 : vector<32x1xf32> to vector<1x32x1xf32>
    tpu.vector_store %arg6[%c0_48, %c0_49, %c0_50], %96 {strides = array<i32>} : memref<1x32x2xf32, #tpu.memory_space<vmem>>, vector<1x32x1xf32>,
    %97 = arith.mulf %88, %88 : vector<32x256xf32>
    %cst_51 = arith.constant dense<0.000000e+00> : vector<32xf32>
    %98 = vector.multi_reduction <add>, %97, %cst_51 [1] : vector<32x256xf32> to vector<32xf32>
    %99 = vector.shape_cast %98 : vector<32xf32> to vector<32x1xf32>
    %c0_52 = arith.constant 0 : index
    %c0_53 = arith.constant 0 : index
    %c1 = arith.constant 1 : index
    %100 = vector.load %arg6[%c0_52, %c0_53, %c1] : memref<1x32x2xf32, #tpu.memory_space<vmem>>, vector<1x32x1xf32>
    %101 = vector.shape_cast %100 : vector<1x32x1xf32> to vector<32x1xf32>
    %102 = vector.shape_cast %99 : vector<32x1xf32> to vector<1x32x1xf32>
    tpu.vector_store %arg6[%c0_52, %c0_53, %c1], %102 {strides = array<i32>} : memref<1x32x2xf32, #tpu.memory_space<vmem>>, vector<1x32x1xf32>,
    return
  }
  func.func @transform_0(%arg0: i32) -> (i32, i32, i32) {
    %c0_i32 = arith.constant 0 : i32
    %c0_i32_0 = arith.constant 0 : i32
    %c0_i32_1 = arith.constant 0 : i32
    return %arg0, %c0_i32, %c0_i32_0 : i32, i32, i32
  }
  func.func @transform_1(%arg0: i32) -> (i32, i32) {
    %c0_i32 = arith.constant 0 : i32
    %c0_i32_0 = arith.constant 0 : i32
    %c0_i32_1 = arith.constant 0 : i32
    return %c0_i32, %c0_i32_0 : i32, i32
  }
  func.func @transform_2(%arg0: i32) -> (i32, i32) {
    %c0_i32 = arith.constant 0 : i32
    %c0_i32_0 = arith.constant 0 : i32
    %c0_i32_1 = arith.constant 0 : i32
    return %c0_i32, %c0_i32_0 : i32, i32
  }
  func.func @transform_3(%arg0: i32) -> (i32, i32) {
    %c0_i32 = arith.constant 0 : i32
    %c0_i32_0 = arith.constant 0 : i32
    %c0_i32_1 = arith.constant 0 : i32
    return %c0_i32, %c0_i32_0 : i32, i32
  }
  func.func @transform_4(%arg0: i32) -> (i32, i32, i32) {
    %c0_i32 = arith.constant 0 : i32
    %c0_i32_0 = arith.constant 0 : i32
    %c0_i32_1 = arith.constant 0 : i32
    return %arg0, %c0_i32, %c0_i32_0 : i32, i32, i32
  }
  func.func @transform_5(%arg0: i32) -> (i32, i32, i32) {
    %c0_i32 = arith.constant 0 : i32
    %c0_i32_0 = arith.constant 0 : i32
    %c0_i32_1 = arith.constant 0 : i32
    return %arg0, %c0_i32, %c0_i32_0 : i32, i32, i32
  }
}

module attributes {stable_mosaic.version = 11 : i64} {
  func.func @_bn_relu_kernel(%arg0: i32, %arg1: memref<1x32x256xf32, #tpu.memory_space<vmem>>, %arg2: memref<32x1xf32, #tpu.memory_space<vmem>>, %arg3: memref<32x1xf32, #tpu.memory_space<vmem>>, %arg4: memref<1x32x256xf32, #tpu.memory_space<vmem>>) attributes {dimension_semantics = [#tpu.dimension_semantics<parallel>], iteration_bounds = array<i64: 2>, scalar_prefetch = 0 : i64, scratch_operands = 0 : i64, tpu.core_type = #tpu.core_type<tc>, window_params = [{transform_indices = @transform_0, window_bounds = array<i64: 1, 32, 256>}, {pipeline_mode = #tpu.pipeline_mode<synchronous>, transform_indices = @transform_1, window_bounds = array<i64: 32, 1>}, {pipeline_mode = #tpu.pipeline_mode<synchronous>, transform_indices = @transform_2, window_bounds = array<i64: 32, 1>}, {transform_indices = @transform_3, window_bounds = array<i64: 1, 32, 256>}]} {
    %c0 = arith.constant 0 : index
    %c0_0 = arith.constant 0 : index
    %c0_1 = arith.constant 0 : index
    %0 = vector.load %arg1[%c0, %c0_0, %c0_1] : memref<1x32x256xf32, #tpu.memory_space<vmem>>, vector<1x32x256xf32>
    %1 = vector.shape_cast %0 : vector<1x32x256xf32> to vector<32x256xf32>
    %c0_2 = arith.constant 0 : index
    %c0_3 = arith.constant 0 : index
    %2 = vector.load %arg2[%c0_2, %c0_3] : memref<32x1xf32, #tpu.memory_space<vmem>>, vector<32x1xf32>
    %3 = vector.broadcast %2 : vector<32x1xf32> to vector<32x256xf32>
    %4 = arith.mulf %1, %3 : vector<32x256xf32>
    %c0_4 = arith.constant 0 : index
    %c0_5 = arith.constant 0 : index
    %5 = vector.load %arg3[%c0_4, %c0_5] : memref<32x1xf32, #tpu.memory_space<vmem>>, vector<32x1xf32>
    %6 = vector.broadcast %5 : vector<32x1xf32> to vector<32x256xf32>
    %7 = arith.addf %4, %6 : vector<32x256xf32>
    %cst = arith.constant 0.000000e+00 : f32
    %8 = vector.broadcast %cst : f32 to vector<32x256xf32>
    %9 = arith.maximumf %7, %8 : vector<32x256xf32>
    %c0_6 = arith.constant 0 : index
    %c0_7 = arith.constant 0 : index
    %c0_8 = arith.constant 0 : index
    %10 = vector.load %arg4[%c0_6, %c0_7, %c0_8] : memref<1x32x256xf32, #tpu.memory_space<vmem>>, vector<1x32x256xf32>
    %11 = vector.shape_cast %10 : vector<1x32x256xf32> to vector<32x256xf32>
    %12 = vector.shape_cast %9 : vector<32x256xf32> to vector<1x32x256xf32>
    tpu.vector_store %arg4[%c0_6, %c0_7, %c0_8], %12 {strides = array<i32>} : memref<1x32x256xf32, #tpu.memory_space<vmem>>, vector<1x32x256xf32>,
    return
  }
  func.func @transform_0(%arg0: i32) -> (i32, i32, i32) {
    %c0_i32 = arith.constant 0 : i32
    %c0_i32_0 = arith.constant 0 : i32
    %c0_i32_1 = arith.constant 0 : i32
    return %arg0, %c0_i32, %c0_i32_0 : i32, i32, i32
  }
  func.func @transform_1(%arg0: i32) -> (i32, i32) {
    %c0_i32 = arith.constant 0 : i32
    %c0_i32_0 = arith.constant 0 : i32
    %c0_i32_1 = arith.constant 0 : i32
    return %c0_i32, %c0_i32_0 : i32, i32
  }
  func.func @transform_2(%arg0: i32) -> (i32, i32) {
    %c0_i32 = arith.constant 0 : i32
    %c0_i32_0 = arith.constant 0 : i32
    %c0_i32_1 = arith.constant 0 : i32
    return %c0_i32, %c0_i32_0 : i32, i32
  }
  func.func @transform_3(%arg0: i32) -> (i32, i32, i32) {
    %c0_i32 = arith.constant 0 : i32
    %c0_i32_0 = arith.constant 0 : i32
    %c0_i32_1 = arith.constant 0 : i32
    return %arg0, %c0_i32, %c0_i32_0 : i32, i32, i32
  }
}

</mosaic_0001>

<llo_original>
// kernel: up_forward.4
$region0: #{up_forward.4}
  #allocation0 [shape = 'u32[]', space=smem, size = 0x4, offset = 0x4, fixed_abs, tag = 'smem constant byte address 0x4 - core index']
  #allocation1 [shape = 'u32[144,128]{1,0:T(1,128)}', space=vmem, size = 0x12000, scoped, tag = 'internal scratch']
  #allocation2 [shape = 'bf16[16,512]{1,0:T(16,128)(2,1)}', space=vmem, size = 0x4000, scoped, tag = 'scratch operand']
  #allocation3 [shape = 'bf16[144,256]{1,0:T(16,128)(2,1)}', space=vmem, size = 0x12000, scoped, tag = 'scratch operand']
  %s0 = inlined_call_operand.vmem [shape: f32[2,16,256], index: 0, kind: input, shape index: {}]
  %s1 = inlined_call_operand.vmem [shape: f32[16,1], index: 1, kind: input, shape index: {}]
  %s2 = inlined_call_operand.vmem [shape: f32[16,1], index: 2, kind: input, shape index: {}]
  %s3 = inlined_call_operand.vmem [shape: bf16[32,144], index: 3, kind: input, shape index: {}]
  %s4 = inlined_call_operand.vmem [shape: f32[2,32,256], index: 4, kind: output, shape index: {0}]
  %s5 = inlined_call_operand.vmem [shape: f32[2,32,2], index: 5, kind: output, shape index: {1}]
  %6 = xla_tuple %s4, %s5
  %s7 = sld [smem:[#allocation0]]
  $region57: #{up_forward.4} parent=0
    _
  %s9 = ssub.s32 1, %s7
  %s10 = scalar_select 0, %s9, %s7
  loop: start=0, step=1, limit=4
  $region2: #{up_forward.4} parent=0 // loop_pre_header
    _
  $region3: #{up_forward.4} parent=0 // loop_header
    %s12 = sphi 0, %s16
    %p13 = scmp.ge.s32.totalorder %s12, 4
    %s22 = sphi 0, %s24
    %s25 = sphi 0, %s22
    %s26 = sphi 0, %s25
    %s42 = sphi 0, %s26
    %s46 = sphi 0, %s46
    %s48 = sphi 0, %s46
    %s49 = sphi 0, %s48
    %s63 = sphi 0, %s49
    %s67 = sphi 0, %s67
    %s69 = sphi 0, %s67
    %s70 = sphi 0, %s69
    %s84 = sphi 0, %s70
    %s88 = sphi 0, %s88
    %s90 = sphi 0, %s88
    %s91 = sphi 0, %s90
    %s105 = sphi 0, %s91
    %s111 = sphi 0, %s113
    %s114 = sphi 0, %s111
    %s115 = sphi 0, %s114
    %s131 = sphi 0, %s115
    %s137 = sphi 0, %s139
    %s140 = sphi 0, %s137
    %s141 = sphi 0, %s140
    %s157 = sphi 0, %s141
  $region4: #{up_forward.4} parent=0 // loop_header_branch
    %15 = sbr.rel (%p13) target = $region8
  $region5: #{up_forward.4} parent=0 // loop_body
    %s17 = ssub.s32 %s12, 1
    %s18 = ssub.s32 %s12, 2
    %s19 = sadd.s32 %s12, 1
    %s20 = ssub.s32 %s12, %s19
    %p21 = scmp.eq.s32.totalorder %s20, 0
    %s23 = sadd.s32 %s22, 1
    %s24 = scalar_select %p21, %s22, %s23
    %p27 = pneg %p21
    %p28 = scmp.eq.s32.totalorder %s12, 1
    %p29 = por %p27, %p28
    %p30 = scmp.ne.s32.totalorder %s22, %s25
    %p31 = scmp.eq.s32.totalorder %s12, 0
    %p32 = por %p30, %p31
    %p33 = scmp.ne.s32.totalorder %s22, %s25
    %p34 = scmp.eq.s32.totalorder %s17, 1
    %p35 = por %p33, %p34
    %p36 = scmp.ne.s32.totalorder %s25, %s26
    %p37 = scmp.eq.s32.totalorder %s17, 0
    %p38 = por %p36, %p37
    %p39 = scmp.ne.s32.totalorder %s25, %s26
    %p40 = scmp.eq.s32.totalorder %s18, 1
    %p41 = por %p39, %p40
    %p43 = scmp.ne.s32.totalorder %s26, %s42
    %p44 = scmp.eq.s32.totalorder %s18, 0
    %p45 = por %p43, %p44
    %s47 = sadd.s32 %s46, 1
    %p50 = scmp.eq.s32.totalorder %s12, 1
    %p51 = scmp.ne.s32.totalorder %s46, %s48
    %p52 = scmp.eq.s32.totalorder %s12, 0
    %p53 = por %p51, %p52
    %p54 = scmp.ne.s32.totalorder %s46, %s48
    %p55 = scmp.eq.s32.totalorder %s17, 1
    %p56 = por %p54, %p55
    %p57 = scmp.ne.s32.totalorder %s48, %s49
    %p58 = scmp.eq.s32.totalorder %s17, 0
    %p59 = por %p57, %p58
    %p60 = scmp.ne.s32.totalorder %s48, %s49
    %p61 = scmp.eq.s32.totalorder %s18, 1
    %p62 = por %p60, %p61
    %p64 = scmp.ne.s32.totalorder %s49, %s63
    %p65 = scmp.eq.s32.totalorder %s18, 0
    %p66 = por %p64, %p65
    %s68 = sadd.s32 %s67, 1
    %p71 = scmp.eq.s32.totalorder %s12, 1
    %p72 = scmp.ne.s32.totalorder %s67, %s69
    %p73 = scmp.eq.s32.totalorder %s12, 0
    %p74 = por %p72, %p73
    %p75 = scmp.ne.s32.totalorder %s67, %s69
    %p76 = scmp.eq.s32.totalorder %s17, 1
    %p77 = por %p75, %p76
    %p78 = scmp.ne.s32.totalorder %s69, %s70
    %p79 = scmp.eq.s32.totalorder %s17, 0
    %p80 = por %p78, %p79
    %p81 = scmp.ne.s32.totalorder %s69, %s70
    %p82 = scmp.eq.s32.totalorder %s18, 1
    %p83 = por %p81, %p82
    %p85 = scmp.ne.s32.totalorder %s70, %s84
    %p86 = scmp.eq.s32.totalorder %s18, 0
    %p87 = por %p85, %p86
    %s89 = sadd.s32 %s88, 1
    %p92 = scmp.eq.s32.totalorder %s12, 1
    %p93 = scmp.ne.s32.totalorder %s88, %s90
    %p94 = scmp.eq.s32.totalorder %s12, 0
    %p95 = por %p93, %p94
    %p96 = scmp.ne.s32.totalorder %s88, %s90
    %p97 = scmp.eq.s32.totalorder %s17, 1
    %p98 = por %p96, %p97
    %p99 = scmp.ne.s32.totalorder %s90, %s91
    %p100 = scmp.eq.s32.totalorder %s17, 0
    %p101 = por %p99, %p100
    %p102 = scmp.ne.s32.totalorder %s90, %s91
    %p103 = scmp.eq.s32.totalorder %s18, 1
    %p104 = por %p102, %p103
    %p106 = scmp.ne.s32.totalorder %s91, %s105
    %p107 = scmp.eq.s32.totalorder %s18, 0
    %p108 = por %p106, %p107
    %s109 = ssub.s32 %s12, %s19
    %p110 = scmp.eq.s32.totalorder %s109, 0
    %s112 = sadd.s32 %s111, 1
    %s113 = scalar_select %p110, %s111, %s112
    %p116 = pneg %p110
    %p117 = scmp.eq.s32.totalorder %s12, 1
    %p118 = por %p116, %p117
    %p119 = scmp.ne.s32.totalorder %s111, %s114
    %p120 = scmp.eq.s32.totalorder %s12, 0
    %p121 = por %p119, %p120
    %p122 = scmp.ne.s32.totalorder %s111, %s114
    %p123 = scmp.eq.s32.totalorder %s17, 1
    %p124 = por %p122, %p123
    %p125 = scmp.ne.s32.totalorder %s114, %s115
    %p126 = scmp.eq.s32.totalorder %s17, 0
    %p127 = por %p125, %p126
    %p128 = scmp.ne.s32.totalorder %s114, %s115
    %p129 = scmp.eq.s32.totalorder %s18, 1
    %p130 = por %p128, %p129
    %p132 = scmp.ne.s32.totalorder %s115, %s131
    %p133 = scmp.eq.s32.totalorder %s18, 0
    %p134 = por %p132, %p133
    %s135 = ssub.s32 %s12, %s19
    %p136 = scmp.eq.s32.totalorder %s135, 0
    %s138 = sadd.s32 %s137, 1
    %s139 = scalar_select %p136, %s137, %s138
    %p142 = pneg %p136
    %p143 = scmp.eq.s32.totalorder %s12, 1
    %p144 = por %p142, %p143
    %p145 = scmp.ne.s32.totalorder %s137, %s140
    %p146 = scmp.eq.s32.totalorder %s12, 0
    %p147 = por %p145, %p146
    %p148 = scmp.ne.s32.totalorder %s137, %s140
    %p149 = scmp.eq.s32.totalorder %s17, 1
    %p150 = por %p148, %p149
    %p151 = scmp.ne.s32.totalorder %s140, %s141
    %p152 = scmp.eq.s32.totalorder %s17, 0
    %p153 = por %p151, %p152
    %p154 = scmp.ne.s32.totalorder %s140, %s141
    %p155 = scmp.eq.s32.totalorder %s18, 1
    %p156 = por %p154, %p155
    %p158 = scmp.ne.s32.totalorder %s141, %s157
    %p159 = scmp.eq.s32.totalorder %s18, 0
    %p160 = por %p158, %p159
    %p161 = scmp.le.s32.totalorder 1, %s12
    %p162 = scmp.lt.s32.totalorder %s12, 3
    %p163 = pnand %p161, %p162
    %p164 = pneg %p163
    // Predicated region
    $region9: #{up_forward.4} parent=5 // pred_check
      _
    $region10: #{up_forward.4} parent=5 // pred_check_branch
      %166 = sbr.rel (%p163) target = $region12
    $region11: #{up_forward.4} parent=5 // pred_region
      %s167 = ssub.s32 %s12, 1
      // Predicated region
      $region13: #{up_forward.4} parent=11 // pred_check
        %p168 = pneg %p59
      $region14: #{up_forward.4} parent=11 // pred_check_branch
        %170 = sbr.rel (%p168) target = $region16
      $region15: #{up_forward.4} parent=11 // pred_region
        _
      $region16: #{up_forward.4} parent=11 // pred_fallthru
        _
      // Predicated region
      $region17: #{up_forward.4} parent=11 // pred_check
        %p171 = pneg %p80
      $region18: #{up_forward.4} parent=11 // pred_check_branch
        %173 = sbr.rel (%p171) target = $region20
      $region19: #{up_forward.4} parent=11 // pred_region
        _
      $region20: #{up_forward.4} parent=11 // pred_fallthru
        _
      // Predicated region
      $region21: #{up_forward.4} parent=11 // pred_check
        %p174 = pneg %p101
      $region22: #{up_forward.4} parent=11 // pred_check_branch
        %176 = sbr.rel (%p174) target = $region24
      $region23: #{up_forward.4} parent=11 // pred_region
        _
      $region24: #{up_forward.4} parent=11 // pred_fallthru
        _
    $region12: #{up_forward.4} parent=5 // pred_fallthru
      _
    %p177 = scmp.lt.s32.totalorder %s12, 2
    // Predicated region
    $region25: #{up_forward.4} parent=5 // pred_check
      %p178 = pneg %p177
    $region26: #{up_forward.4} parent=5 // pred_check_branch
      %180 = sbr.rel (%p178) target = $region28
    $region27: #{up_forward.4} parent=5 // pred_region
      // Predicated region
      $region29: #{up_forward.4} parent=27 // pred_check
        %p181 = pneg %p32
      $region30: #{up_forward.4} parent=27 // pred_check_branch
        %183 = sbr.rel (%p181) target = $region32
      $region31: #{up_forward.4} parent=27 // pred_region
        %p184 = scmp.lt.s32.totalorder %s12, 1
        %s185 = scalar_select %p184, %s12, 1
        %s186 = smul.addr %s185, 4
        %s187 = smul.addr %s186, 8
        %s188 = scalar_lea.vmem %s0, %s187
      $region32: #{up_forward.4} parent=27 // pred_fallthru
        _
    $region28: #{up_forward.4} parent=5 // pred_fallthru
      _
    %p189 = scmp.le.s32.totalorder 1, %s12
    %p190 = scmp.lt.s32.totalorder %s12, 3
    %p191 = pnand %p189, %p190
    %p192 = pneg %p191
    // Predicated region
    $region33: #{up_forward.4} parent=5 // pred_check
      _
    $region34: #{up_forward.4} parent=5 // pred_check_branch
      %194 = sbr.rel (%p191) target = $region36
    $region35: #{up_forward.4} parent=5 // pred_region
      %s195 = ssub.s32 %s12, 1
      %p196 = scmp.lt.s32.totalorder %s17, 1
      %s197 = scalar_select %p196, %s17, 1
      %s198 = smul.addr %s197, 4
      %s199 = smul.addr %s198, 8
      %s200 = scalar_lea.vmem %s0, %s199
      %p201 = pneg %p38
      %p202 = pneg %p35
      %p203 = pneg %p59
      %p204 = pneg %p56
      %p205 = pneg %p80
      %p206 = pneg %p77
      %p207 = pneg %p101
      %p208 = pneg %p98
      %p209 = pneg %p127
      %p210 = pneg %p124
      %p211 = scmp.lt.s32.totalorder %s17, 1
      %s212 = scalar_select %p211, %s17, 1
      %s213 = smul.addr %s212, 8
      %s214 = smul.addr %s213, 8
      %s215 = scalar_lea.vmem %s4, %s214
      %p216 = pneg %p153
      %p217 = pneg %p150
      %p218 = scmp.lt.s32.totalorder %s17, 1
      %s219 = scalar_select %p218, %s17, 1
      %s220 = smul.addr %s219, 4
      %s221 = smul.addr %s220, 8
      %s222 = scalar_lea.vmem %s5, %s221
      %p223 = scmp.lt.s32.totalorder %s17, 1
      %s224 = scalar_select %p223, %s17, 1
      %s225 = smul.addr %s224, 4
      %s226 = smul.addr %s225, 8
      %s227 = scalar_lea.vmem %s0, %s226
      %p228 = scmp.lt.s32.totalorder %s17, 1
      %s229 = scalar_select %p228, %s17, 1
      %s230 = smul.addr %s229, 8
      %s231 = smul.addr %s230, 8
      %s232 = scalar_lea.vmem %s4, %s231
      %p233 = scmp.lt.s32.totalorder %s17, 1
      %s234 = scalar_select %p233, %s17, 1
      %s235 = smul.addr %s234, 4
      %s236 = smul.addr %s235, 8
      %s237 = scalar_lea.vmem %s5, %s236
      %v241 = vld [vmem:[%s227] sm:$0xff]
      %v242 = vld [vmem:[%s227 + $0x8] sm:$0xff]
      %v243 = vld [vmem:[%s227 + $0x10] sm:$0xff]
      %v244 = vld [vmem:[%s227 + $0x18] sm:$0xff]
      %v245 = vld [vmem:[%s1] sm:$0xff]
      %v246 = vld [vmem:[%s1 + $0x8] sm:$0xff]
      %248 = vset.pattern.permute.xlu0 0
      %249 = vperm.xlu0 %248, %v245
      %v250 = vpop.permute.xlu0 %249
      %253 = vset.pattern.permute.xlu0 0
      %254 = vperm.xlu0 %253, %v246
      %v255 = vpop.permute.xlu0 %254
      %v257 = vmul.f32 %v241, %v250
      %v258 = vmul.f32 %v242, %v250
      %v259 = vmul.f32 %v243, %v255
      %v260 = vmul.f32 %v244, %v255
      %v261 = vld [vmem:[%s2] sm:$0xff]
      %v262 = vld [vmem:[%s2 + $0x8] sm:$0xff]
      %264 = vset.pattern.permute.xlu0 0
      %265 = vperm.xlu0 %264, %v261
      %v266 = vpop.permute.xlu0 %265
      %269 = vset.pattern.permute.xlu0 0
      %270 = vperm.xlu0 %269, %v262
      %v271 = vpop.permute.xlu0 %270
      %v273 = vadd.f32 %v257, %v266
      %v274 = vadd.f32 %v258, %v266
      %v275 = vadd.f32 %v259, %v271
      %v276 = vadd.f32 %v260, %v271
      %v277 = vmax.f32 %v273, 0.0
      %v278 = vmax.f32 %v274, 0.0
      %v279 = vmax.f32 %v275, 0.0
      %v280 = vmax.f32 %v276, 0.0
      %281 = vst [vmem:[#allocation2] sm:$0xff] 0
      %282 = vst [vmem:[#allocation2 + $0x18] sm:$0xff] 0
      %v283 = vpack.c.bf16 %v279, %v277
      %v284 = vpack.c.bf16 %v280, %v278
      %285 = vst [vmem:[#allocation2 + $0x8] sm:$0xff] %v283
      %286 = vst [vmem:[#allocation2 + $0x10] sm:$0xff] %v284
      %v287 = vlaneseq
      %v288 = vand.u32 %v287, 127
      %v289 = vadd.s32 %v288, 128
      %vm290 = vcmp.lt.s32.totalorder %v288, 0
      %v291 = vsub.s32 0, %v288
      %v292 = vsel %vm290, %v291, %v288
      %v293 = vshrl.u32 %v292, 4
      %v294 = vand.u32 %v292, 15
      %v295 = vsub.s32 0, %v294
      %v296 = vsel %vm290, %v295, %v294
      %vm297 = vcmp.lt.s32.totalorder %v289, 0
      %v298 = vsub.s32 0, %v289
      %v299 = vsel %vm297, %v298, %v289
      %v300 = vshrl.u32 %v299, 4
      %v301 = vand.u32 %v299, 15
      %v302 = vsub.s32 0, %v301
      %v303 = vsel %vm297, %v302, %v301
      %vm304 = vcmp.ne.s32.totalorder %v296, 0
      %vm305 = vcmp.ne.s32.totalorder %v303, 0
      %vm306 = vcmp.lt.s32.totalorder %v296, 0
      %vm307 = vcmp.lt.s32.totalorder %v303, 0
      %vm308 = vmand %vm306, %vm304
      %vm309 = vmand %vm307, %vm305
      %v310 = vadd.s32 %v296, 16
      %v311 = vadd.s32 %v303, 16
      %v312 = vsel %vm308, %v310, %v296
      %v313 = vsel %vm309, %v311, %v303
      %vm314 = vcmp.ne.s32.totalorder %v312, 0
      %vm315 = vcmp.ne.s32.totalorder %v313, 0
      %vm316 = vcmp.ne.s32.totalorder %v312, 15
      %vm317 = vcmp.ne.s32.totalorder %v313, 15
      %v318 = vld [vmem:[#allocation2] sm:$0xff]
      %v319 = vld [vmem:[#allocation2 + $0x8] sm:$0xff]
      %v320 = vld [vmem:[#allocation2 + $0x10] sm:$0xff]
      %v321 = vsel %vm314, 1, 0
      %v322 = vsel %vm315, 1, 0
      %vm323 = vcmp.eq.s32.totalorder %v321, 1
      %vm324 = vcmp.eq.s32.totalorder %v322, 1
      %vm325 = vmpackc.low %vm324, %vm323
      %v326 = vsel %vm325, 65537, 0
      %v327 = vlaneseq
      %v328 = vshrl.u32 %v327, 7
      %v329 = vsub.s32 0, %v328
      %v330 = vrot.slane %v326, %v329
      %v331 = vlaneseq
      %v332 = vshrl.u32 %v331, 7
      %v333 = vsub.s32 4, %v332
      %v334 = vrot.slane %v326, %v333
      %335 = vrot.lane.b32.xlu0 %v330, 111
      %v336 = vpop.permute.xlu0 %335
      %337 = vrot.lane.b32.xlu0 %v334, 111
      %v338 = vpop.permute.xlu0 %337
      %vm339 = vcmask 908288
      %v340 = vsel %vm339, %v336, %v338
      %vm341 = vcmp.ne.s16.totalorder %v336, 0
      %vm342 = vcmp.ne.s16.totalorder %v340, 0
      %vm343 = vcmp.ne.s16.totalorder %v338, 0
      %v344 = vsel %vm341, %v318, 0
      %v345 = vsel %vm342, %v319, 0
      %v346 = vsel %vm343, %v320, 0
      %350 = vrot.lane.b32.xlu0 %v344, 17
      %v351 = vpop.permute.xlu0 %350
      %352 = vrot.lane.b32.xlu0 %v345, 17
      %v353 = vpop.permute.xlu0 %352
      %354 = vrot.lane.b32.xlu0 %v346, 17
      %v355 = vpop.permute.xlu0 %354
      %vm356 = vcmask 138240
      %v357 = vsel %vm356, %v351, %v353
      %v358 = vsel %vm356, %v353, %v355
      %361 = vst [vmem:[#allocation3] sm:$0xff] %v357
      %362 = vst [vmem:[#allocation3 + $0x8] sm:$0xff] %v358
      %v363 = vld [vmem:[#allocation2] sm:$0xff]
      %v364 = vld [vmem:[#allocation2 + $0x8] sm:$0xff]
      %v365 = vld [vmem:[#allocation2 + $0x10] sm:$0xff]
      %369 = vrot.lane.b32.xlu0 %v363, 16
      %v370 = vpop.permute.xlu0 %369
      %371 = vrot.lane.b32.xlu0 %v364, 16
      %v372 = vpop.permute.xlu0 %371
      %373 = vrot.lane.b32.xlu0 %v365, 16
      %v374 = vpop.permute.xlu0 %373
      %vm375 = vcmask 130048
      %v376 = vsel %vm375, %v370, %v372
      %v377 = vsel %vm375, %v372, %v374
      %380 = vst [vmem:[#allocation3 + $0x10] sm:$0xff] %v376
      %381 = vst [vmem:[#allocation3 + $0x18] sm:$0xff] %v377
      %v382 = vld [vmem:[#allocation2] sm:$0xff]
      %v383 = vld [vmem:[#allocation2 + $0x8] sm:$0xff]
      %v384 = vld [vmem:[#allocation2 + $0x10] sm:$0xff]
      %v385 = vsel %vm316, 1, 0
      %v386 = vsel %vm317, 1, 0
      %vm387 = vcmp.eq.s32.totalorder %v385, 1
      %vm388 = vcmp.eq.s32.totalorder %v386, 1
      %vm389 = vmpackc.low %vm388, %vm387
      %v390 = vsel %vm389, 65537, 0
      %v391 = vlaneseq
      %v392 = vshrl.u32 %v391, 7
      %v393 = vsub.s32 0, %v392
      %v394 = vrot.slane %v390, %v393
      %v395 = vlaneseq
      %v396 = vshrl.u32 %v395, 7
      %v397 = vsub.s32 4, %v396
      %v398 = vrot.slane %v390, %v397
      %399 = vrot.lane.b32.xlu0 %v394, 113
      %v400 = vpop.permute.xlu0 %399
      %401 = vrot.lane.b32.xlu0 %v398, 113
      %v402 = vpop.permute.xlu0 %401
      %vm403 = vcmask 924672
      %v404 = vsel %vm403, %v400, %v402
      %vm405 = vcmp.ne.s16.totalorder %v400, 0
      %vm406 = vcmp.ne.s16.totalorder %v404, 0
      %vm407 = vcmp.ne.s16.totalorder %v402, 0
      %v408 = vsel %vm405, %v382, 0
      %v409 = vsel %vm406, %v383, 0
      %v410 = vsel %vm407, %v384, 0
      %414 = vrot.lane.b32.xlu0 %v408, 15
      %v415 = vpop.permute.xlu0 %414
      %416 = vrot.lane.b32.xlu0 %v409, 15
      %v417 = vpop.permute.xlu0 %416
      %418 = vrot.lane.b32.xlu0 %v410, 15
      %v419 = vpop.permute.xlu0 %418
      %vm420 = vcmask 121856
      %v421 = vsel %vm420, %v415, %v417
      %v422 = vsel %vm420, %v417, %v419
      %425 = vst [vmem:[#allocation3 + $0x20] sm:$0xff] %v421
      %426 = vst [vmem:[#allocation3 + $0x28] sm:$0xff] %v422
      %v427 = vld [vmem:[#allocation2] sm:$0xff]
      %v428 = vld [vmem:[#allocation2 + $0x8] sm:$0xff]
      %v429 = vld [vmem:[#allocation2 + $0x10] sm:$0xff]
      %430 = vrot.lane.b32.xlu0 %v330, 127
      %v431 = vpop.permute.xlu0 %430
      %432 = vrot.lane.b32.xlu0 %v334, 127
      %v433 = vpop.permute.xlu0 %432
      %vm434 = vcmask 1039360
      %v435 = vsel %vm434, %v431, %v433
      %vm436 = vcmp.ne.s16.totalorder %v431, 0
      %vm437 = vcmp.ne.s16.totalorder %v435, 0
      %vm438 = vcmp.ne.s16.totalorder %v433, 0
      %v439 = vsel %vm436, %v427, 0
      %v440 = vsel %vm437, %v428, 0
      %v441 = vsel %vm438, %v429, 0
      %445 = vrot.lane.b32.xlu0 %v439, 1
      %v446 = vpop.permute.xlu0 %445
      %447 = vrot.lane.b32.xlu0 %v440, 1
      %v448 = vpop.permute.xlu0 %447
      %449 = vrot.lane.b32.xlu0 %v441, 1
      %v450 = vpop.permute.xlu0 %449
      %vm451 = vcmask 7168
      %v452 = vsel %vm451, %v446, %v448
      %v453 = vsel %vm451, %v448, %v450
      %456 = vst [vmem:[#allocation3 + $0x30] sm:$0xff] %v452
      %457 = vst [vmem:[#allocation3 + $0x38] sm:$0xff] %v453
      %v458 = vld [vmem:[#allocation2 + $0x8] sm:$0xff]
      %v459 = vld [vmem:[#allocation2 + $0x10] sm:$0xff]
      %460 = vst [vmem:[#allocation3 + $0x40] sm:$0xff] %v458
      %461 = vst [vmem:[#allocation3 + $0x48] sm:$0xff] %v459
      %v462 = vld [vmem:[#allocation2 + $0x8] sm:$0xff]
      %v463 = vld [vmem:[#allocation2 + $0x10] sm:$0xff]
      %v464 = vld [vmem:[#allocation2 + $0x18] sm:$0xff]
      %465 = vrot.lane.b32.xlu0 %v394, 1
      %v466 = vpop.permute.xlu0 %465
      %467 = vrot.lane.b32.xlu0 %v398, 1
      %v468 = vpop.permute.xlu0 %467
      %v469 = vsel %vm451, %v466, %v468
      %vm470 = vcmp.ne.s16.totalorder %v466, 0
      %vm471 = vcmp.ne.s16.totalorder %v469, 0
      %vm472 = vcmp.ne.s16.totalorder %v468, 0
      %v473 = vsel %vm470, %v462, 0
      %v474 = vsel %vm471, %v463, 0
      %v475 = vsel %vm472, %v464, 0
      %479 = vrot.lane.b32.xlu0 %v473, 127
      %v480 = vpop.permute.xlu0 %479
      %481 = vrot.lane.b32.xlu0 %v474, 127
      %v482 = vpop.permute.xlu0 %481
      %483 = vrot.lane.b32.xlu0 %v475, 127
      %v484 = vpop.permute.xlu0 %483
      %v485 = vsel %vm434, %v480, %v482
      %v486 = vsel %vm434, %v482, %v484
      %489 = vst [vmem:[#allocation3 + $0x50] sm:$0xff] %v485
      %490 = vst [vmem:[#allocation3 + $0x58] sm:$0xff] %v486
      %v491 = vld [vmem:[#allocation2 + $0x8] sm:$0xff]
      %v492 = vld [vmem:[#allocation2 + $0x10] sm:$0xff]
      %v493 = vld [vmem:[#allocation2 + $0x18] sm:$0xff]
      %494 = vrot.lane.b32.xlu0 %v330, 15
      %v495 = vpop.permute.xlu0 %494
      %496 = vrot.lane.b32.xlu0 %v334, 15
      %v497 = vpop.permute.xlu0 %496
      %v498 = vsel %vm420, %v495, %v497
      %vm499 = vcmp.ne.s16.totalorder %v495, 0
      %vm500 = vcmp.ne.s16.totalorder %v498, 0
      %vm501 = vcmp.ne.s16.totalorder %v497, 0
      %v502 = vsel %vm499, %v491, 0
      %v503 = vsel %vm500, %v492, 0
      %v504 = vsel %vm501, %v493, 0
      %508 = vrot.lane.b32.xlu0 %v502, 113
      %v509 = vpop.permute.xlu0 %508
      %510 = vrot.lane.b32.xlu0 %v503, 113
      %v511 = vpop.permute.xlu0 %510
      %512 = vrot.lane.b32.xlu0 %v504, 113
      %v513 = vpop.permute.xlu0 %512
      %v514 = vsel %vm403, %v509, %v511
      %v515 = vsel %vm403, %v511, %v513
      %518 = vst [vmem:[#allocation3 + $0x60] sm:$0xff] %v514
      %519 = vst [vmem:[#allocation3 + $0x68] sm:$0xff] %v515
      %v520 = vld [vmem:[#allocation2 + $0x8] sm:$0xff]
      %v521 = vld [vmem:[#allocation2 + $0x10] sm:$0xff]
      %v522 = vld [vmem:[#allocation2 + $0x18] sm:$0xff]
      %526 = vrot.lane.b32.xlu0 %v520, 112
      %v527 = vpop.permute.xlu0 %526
      %528 = vrot.lane.b32.xlu0 %v521, 112
      %v529 = vpop.permute.xlu0 %528
      %530 = vrot.lane.b32.xlu0 %v522, 112
      %v531 = vpop.permute.xlu0 %530
      %vm532 = vcmask 916480
      %v533 = vsel %vm532, %v527, %v529
      %v534 = vsel %vm532, %v529, %v531
      %537 = vst [vmem:[#allocation3 + $0x70] sm:$0xff] %v533
      %538 = vst [vmem:[#allocation3 + $0x78] sm:$0xff] %v534
      %v539 = vld [vmem:[#allocation2 + $0x8] sm:$0xff]
      %v540 = vld [vmem:[#allocation2 + $0x10] sm:$0xff]
      %v541 = vld [vmem:[#allocation2 + $0x18] sm:$0xff]
      %542 = vrot.lane.b32.xlu0 %v394, 17
      %v543 = vpop.permute.xlu0 %542
      %544 = vrot.lane.b32.xlu0 %v398, 17
      %v545 = vpop.permute.xlu0 %544
      %v546 = vsel %vm356, %v543, %v545
      %vm547 = vcmp.ne.s16.totalorder %v543, 0
      %vm548 = vcmp.ne.s16.totalorder %v546, 0
      %vm549 = vcmp.ne.s16.totalorder %v545, 0
      %v550 = vsel %vm547, %v539, 0
      %v551 = vsel %vm548, %v540, 0
      %v552 = vsel %vm549, %v541, 0
      %556 = vrot.lane.b32.xlu0 %v550, 111
      %v557 = vpop.permute.xlu0 %556
      %558 = vrot.lane.b32.xlu0 %v551, 111
      %v559 = vpop.permute.xlu0 %558
      %560 = vrot.lane.b32.xlu0 %v552, 111
      %v561 = vpop.permute.xlu0 %560
      %v562 = vsel %vm339, %v557, %v559
      %v563 = vsel %vm339, %v559, %v561
      %566 = vst [vmem:[#allocation3 + $0x80] sm:$0xff] %v562
      %567 = vst [vmem:[#allocation3 + $0x88] sm:$0xff] %v563
      %v568 = vld [vmem:[%s3] sm:$0xff]
      %v569 = vld [vmem:[%s3 + $0x8] sm:$0xff]
      %v570 = vld [vmem:[%s3 + $0x10] sm:$0xff]
      %v571 = vld [vmem:[%s3 + $0x18] sm:$0xff]
      %v572 = vld [vmem:[#allocation3] sm:$0xff]
      %v573 = vld [vmem:[#allocation3 + $0x8] sm:$0xff]
      %v574 = vld [vmem:[#allocation3 + $0x10] sm:$0xff]
      %v575 = vld [vmem:[#allocation3 + $0x18] sm:$0xff]
      %v576 = vld [vmem:[#allocation3 + $0x20] sm:$0xff]
      %v577 = vld [vmem:[#allocation3 + $0x28] sm:$0xff]
      %v578 = vld [vmem:[#allocation3 + $0x30] sm:$0xff]
      %v579 = vld [vmem:[#allocation3 + $0x38] sm:$0xff]
      %v580 = vld [vmem:[#allocation3 + $0x40] sm:$0xff]
      %v581 = vld [vmem:[#allocation3 + $0x48] sm:$0xff]
      %v582 = vld [vmem:[#allocation3 + $0x50] sm:$0xff]
      %v583 = vld [vmem:[#allocation3 + $0x58] sm:$0xff]
      %v584 = vld [vmem:[#allocation3 + $0x60] sm:$0xff]
      %v585 = vld [vmem:[#allocation3 + $0x68] sm:$0xff]
      %v586 = vld [vmem:[#allocation3 + $0x70] sm:$0xff]
      %v587 = vld [vmem:[#allocation3 + $0x78] sm:$0xff]
      %v588 = vld [vmem:[#allocation3 + $0x80] sm:$0xff]
      %v589 = vld [vmem:[#allocation3 + $0x88] sm:$0xff]
      %v594 = vunpack.c.l.b16 %v568
      %v595 = vunpack.c.h.b16 %v568
      %v596 = vunpack.c.l.b16 %v569
      %v597 = vunpack.c.h.b16 %v569
      %v598 = vunpack.c.l.b16 %v570
      %v599 = vunpack.c.h.b16 %v570
      %v600 = vunpack.c.l.b16 %v571
      %v601 = vunpack.c.h.b16 %v571
      %v602 = vpack.c.b16 %v596, %v594
      %v603 = vpack.c.b16 %v597, %v595
      %v604 = vpack.c.b16 %v600, %v598
      %v605 = vpack.c.b16 %v601, %v599
      %vm608 = vcmask 130048
      %v610 = vsel %vm608, %v603, 0
      %v613 = vsel %vm608, %v605, 0
      %615 = vmatprep.subr.bf16.mxu0 %v573
      %616 = vmatpush1.bf16.msra.mxu0 %v572
      %617 = vmatprep.subr.bf16.mxu0 %v575
      %618 = vmatpush1.bf16.msra.mxu0 %v574
      %619 = vmatprep.subr.bf16.mxu0 %v577
      %620 = vmatpush1.bf16.msra.mxu0 %v576
      %621 = vmatprep.subr.bf16.mxu0 %v579
      %622 = vmatpush1.bf16.msra.mxu0 %v578
      %623 = vmatprep.subr.bf16.mxu0 %v581
      %624 = vmatpush1.bf16.msra.mxu0 %v580
      %625 = vmatprep.subr.bf16.mxu0 %v583
      %626 = vmatpush1.bf16.msra.mxu0 %v582
      %627 = vmatprep.subr.bf16.mxu0 %v585
      %628 = vmatpush1.bf16.msra.mxu0 %v584
      %629 = vmatprep.subr.bf16.mxu0 %v587
      %630 = vmatpush1.bf16.msra.mxu0 %v586
      %631 = vmatprep.subr.bf16.mxu0 %v589
      %632 = vmatpush1.bf16.msra.mxu0 %v588
      %633 = vmatprep.subr.bf16.mxu0 0
      %634 = vmatpush1.bf16.msra.mxu0 0
      %635 = vmatprep.subr.bf16.mxu0 0
      %636 = vmatpush1.bf16.msra.mxu0 0
      %637 = vmatprep.subr.bf16.mxu0 0
      %638 = vmatpush1.bf16.msra.mxu0 0
      %639 = vmatprep.subr.bf16.mxu0 0
      %640 = vmatpush1.bf16.msra.mxu0 0
      %641 = vmatprep.subr.bf16.mxu0 0
      %642 = vmatpush1.bf16.msra.mxu0 0
      %643 = vmatprep.subr.bf16.mxu0 0
      %644 = vmatpush1.bf16.msra.mxu0 0
      %645 = vmatprep.subr.bf16.mxu0 0
      %646 = vmatpush1.bf16.msra.mxu0 0
      %647 = vmatprep.mubr.bf16.mxu0 %v610
      %648 = vmatmul.mubr.bf16.gmra.mrb[0].mxu0 %v602
      %v649 = vpop.f32.mrb[0].mxu0
      %v650 = vadd.f32 0.0, %v649
      %v651 = vpop.f32.mrb[0].mxu0
      %v652 = vadd.f32 0.0, %v651
      %v653 = vpop.f32.mrb[0].mxu0
      %v654 = vadd.f32 0.0, %v653
      %v655 = vpop.f32.mrb[0].mxu0
      %v656 = vadd.f32 0.0, %v655
      %657 = vmatprep.mubr.bf16.mxu0 %v613
      %658 = vmatmul.mubr.bf16.gmra.mrb[0].mxu0 %v604
      %v659 = vpop.f32.mrb[0].mxu0
      %v660 = vadd.f32 0.0, %v659
      %v661 = vpop.f32.mrb[0].mxu0
      %v662 = vadd.f32 0.0, %v661
      %v663 = vpop.f32.mrb[0].mxu0
      %v664 = vadd.f32 0.0, %v663
      %v665 = vpop.f32.mrb[0].mxu0
      %v666 = vadd.f32 0.0, %v665
      %667 = vdwg.mxu0
      %668 = vst [vmem:[%s232] sm:$0xff] %v650
      %669 = vst [vmem:[%s232 + $0x8] sm:$0xff] %v652
      %670 = vst [vmem:[%s232 + $0x10] sm:$0xff] %v654
      %671 = vst [vmem:[%s232 + $0x18] sm:$0xff] %v656
      %672 = vst [vmem:[%s232 + $0x20] sm:$0xff] %v660
      %673 = vst [vmem:[%s232 + $0x28] sm:$0xff] %v662
      %674 = vst [vmem:[%s232 + $0x30] sm:$0xff] %v664
      %675 = vst [vmem:[%s232 + $0x38] sm:$0xff] %v666
      %v676 = vadd.f32 %v650, %v652
      %677 = vadd.xlane.f32.xlu0 %v676
      %v678 = vpop.xlane.xlu0 %677
      %v679 = vadd.f32 %v654, %v656
      %680 = vadd.xlane.f32.xlu0 %v679
      %v681 = vpop.xlane.xlu0 %680
      %v682 = vadd.f32 %v660, %v662
      %683 = vadd.xlane.f32.xlu0 %v682
      %v684 = vpop.xlane.xlu0 %683
      %v685 = vadd.f32 %v664, %v666
      %686 = vadd.xlane.f32.xlu0 %v685
      %v687 = vpop.xlane.xlu0 %686
      %vm688 = vcmask 7168
      %689 = vst.msk [vmem:[%s237] sm:$0xff] %vm688, %v678
      %690 = vst.msk [vmem:[%s237 + $0x8] sm:$0xff] %vm688, %v681
      %691 = vst.msk [vmem:[%s237 + $0x10] sm:$0xff] %vm688, %v684
      %692 = vst.msk [vmem:[%s237 + $0x18] sm:$0xff] %vm688, %v687
      %v693 = vmul.f32 %v650, %v650
      %v694 = vmul.f32 %v652, %v652
      %v695 = vmul.f32 %v654, %v654
      %v696 = vmul.f32 %v656, %v656
      %v697 = vmul.f32 %v660, %v660
      %v698 = vmul.f32 %v662, %v662
      %v699 = vmul.f32 %v664, %v664
      %v700 = vmul.f32 %v666, %v666
      %v701 = vadd.f32 %v693, %v694
      %702 = vadd.xlane.f32.xlu0 %v701
      %v703 = vpop.xlane.xlu0 %702
      %v704 = vadd.f32 %v695, %v696
      %705 = vadd.xlane.f32.xlu0 %v704
      %v706 = vpop.xlane.xlu0 %705
      %v707 = vadd.f32 %v697, %v698
      %708 = vadd.xlane.f32.xlu0 %v707
      %v709 = vpop.xlane.xlu0 %708
      %v710 = vadd.f32 %v699, %v700
      %711 = vadd.xlane.f32.xlu0 %v710
      %v712 = vpop.xlane.xlu0 %711
      %vm713 = vcmask 15368
      %714 = vst.msk [vmem:[%s237] sm:$0xff] %vm713, %v703
      %715 = vst.msk [vmem:[%s237 + $0x8] sm:$0xff] %vm713, %v706
      %716 = vst.msk [vmem:[%s237 + $0x10] sm:$0xff] %vm713, %v709
      %717 = vst.msk [vmem:[%s237 + $0x18] sm:$0xff] %vm713, %v712
      %p718 = scmp.lt.s32.totalorder %s17, 1
      %s719 = scalar_select %p718, %s17, 1
      %s720 = smul.addr %s719, 8
      %s721 = smul.addr %s720, 8
      %s722 = scalar_lea.vmem %s4, %s721
      %p723 = scmp.lt.s32.totalorder %s17, 1
      %s724 = scalar_select %p723, %s17, 1
      %s725 = smul.addr %s724, 4
      %s726 = smul.addr %s725, 8
      %s727 = scalar_lea.vmem %s5, %s726
      // Predicated region
      $region37: #{up_forward.4} parent=35 // pred_check
        %p728 = pneg %p124
      $region38: #{up_forward.4} parent=35 // pred_check_branch
        %730 = sbr.rel (%p728) target = $region40
      $region39: #{up_forward.4} parent=35 // pred_region
        _
      $region40: #{up_forward.4} parent=35 // pred_fallthru
        _
      // Predicated region
      $region41: #{up_forward.4} parent=35 // pred_check
        %p731 = pneg %p150
      $region42: #{up_forward.4} parent=35 // pred_check_branch
        %733 = sbr.rel (%p731) target = $region44
      $region43: #{up_forward.4} parent=35 // pred_region
        _
      $region44: #{up_forward.4} parent=35 // pred_fallthru
        _
    $region36: #{up_forward.4} parent=5 // pred_fallthru
      _
    %p734 = scmp.le.s32.totalorder 2, %s12
    // Predicated region
    $region45: #{up_forward.4} parent=5 // pred_check
      %p735 = pneg %p734
    $region46: #{up_forward.4} parent=5 // pred_check_branch
      %737 = sbr.rel (%p735) target = $region48
    $region47: #{up_forward.4} parent=5 // pred_region
      %s738 = ssub.s32 %s12, 2
      // Predicated region
      $region49: #{up_forward.4} parent=47 // pred_check
        %p739 = pneg %p130
      $region50: #{up_forward.4} parent=47 // pred_check_branch
        %741 = sbr.rel (%p739) target = $region52
      $region51: #{up_forward.4} parent=47 // pred_region
        %p742 = scmp.lt.s32.totalorder %s18, 1
        %s743 = scalar_select %p742, %s18, 1
        %s744 = smul.addr %s743, 8
        %s745 = smul.addr %s744, 8
        %s746 = scalar_lea.vmem %s4, %s745
      $region52: #{up_forward.4} parent=47 // pred_fallthru
        _
      // Predicated region
      $region53: #{up_forward.4} parent=47 // pred_check
        %p747 = pneg %p156
      $region54: #{up_forward.4} parent=47 // pred_check_branch
        %749 = sbr.rel (%p747) target = $region56
      $region55: #{up_forward.4} parent=47 // pred_region
        %p750 = scmp.lt.s32.totalorder %s18, 1
        %s751 = scalar_select %p750, %s18, 1
        %s752 = smul.addr %s751, 4
        %s753 = smul.addr %s752, 8
        %s754 = scalar_lea.vmem %s5, %s753
      $region56: #{up_forward.4} parent=47 // pred_fallthru
        _
    $region48: #{up_forward.4} parent=5 // pred_fallthru
      _
  $region6: #{up_forward.4} parent=0 // loop_footer
    %s16 = sadd.s32 1, %s12
  $region7: #{up_forward.4} parent=0 // loop_footer_branch
    %11 = sbr.rel target = $region3
  $region8: #{up_forward.4} parent=0 // loop_exit
    _

// kernel: up_forward.3
$region0: #{up_forward.3}
  #allocation0 [shape = 'u32[]', space=smem, size = 0x4, offset = 0x4, fixed_abs, tag = 'smem constant byte address 0x4 - core index']
  #allocation1 [shape = 'u32[144,128]{1,0:T(1,128)}', space=vmem, size = 0x12000, scoped, tag = 'internal scratch']
  #allocation2 [shape = 'bf16[288,256]{1,0:T(16,128)(2,1)}', space=vmem, size = 0x24000, scoped, tag = 'scratch operand']
  %s0 = inlined_call_operand.vmem [shape: bf16[2,32,512], index: 0, kind: input, shape index: {}]
  %s1 = inlined_call_operand.vmem [shape: bf16[16,288], index: 1, kind: input, shape index: {}]
  %s2 = inlined_call_operand.vmem [shape: f32[2,16,256], index: 2, kind: output, shape index: {0}]
  %s3 = inlined_call_operand.vmem [shape: f32[2,16,2], index: 3, kind: output, shape index: {1}]
  %4 = xla_tuple %s2, %s3
  %s5 = sld [smem:[#allocation0]]
  $region49: #{up_forward.3} parent=0
    _
  %s7 = ssub.s32 1, %s5
  %s8 = scalar_select 0, %s7, %s5
  loop: start=0, step=1, limit=4
  $region2: #{up_forward.3} parent=0 // loop_pre_header
    _
  $region3: #{up_forward.3} parent=0 // loop_header
    %s10 = sphi 0, %s14
    %p11 = scmp.ge.s32.totalorder %s10, 4
    %s20 = sphi 0, %s22
    %s23 = sphi 0, %s20
    %s24 = sphi 0, %s23
    %s40 = sphi 0, %s24
    %s44 = sphi 0, %s44
    %s46 = sphi 0, %s44
    %s47 = sphi 0, %s46
    %s61 = sphi 0, %s47
    %s67 = sphi 0, %s69
    %s70 = sphi 0, %s67
    %s71 = sphi 0, %s70
    %s87 = sphi 0, %s71
    %s93 = sphi 0, %s95
    %s96 = sphi 0, %s93
    %s97 = sphi 0, %s96
    %s113 = sphi 0, %s97
  $region4: #{up_forward.3} parent=0 // loop_header_branch
    %13 = sbr.rel (%p11) target = $region8
  $region5: #{up_forward.3} parent=0 // loop_body
    %s15 = ssub.s32 %s10, 1
    %s16 = ssub.s32 %s10, 2
    %s17 = sadd.s32 %s10, 1
    %s18 = ssub.s32 %s10, %s17
    %p19 = scmp.eq.s32.totalorder %s18, 0
    %s21 = sadd.s32 %s20, 1
    %s22 = scalar_select %p19, %s20, %s21
    %p25 = pneg %p19
    %p26 = scmp.eq.s32.totalorder %s10, 1
    %p27 = por %p25, %p26
    %p28 = scmp.ne.s32.totalorder %s20, %s23
    %p29 = scmp.eq.s32.totalorder %s10, 0
    %p30 = por %p28, %p29
    %p31 = scmp.ne.s32.totalorder %s20, %s23
    %p32 = scmp.eq.s32.totalorder %s15, 1
    %p33 = por %p31, %p32
    %p34 = scmp.ne.s32.totalorder %s23, %s24
    %p35 = scmp.eq.s32.totalorder %s15, 0
    %p36 = por %p34, %p35
    %p37 = scmp.ne.s32.totalorder %s23, %s24
    %p38 = scmp.eq.s32.totalorder %s16, 1
    %p39 = por %p37, %p38
    %p41 = scmp.ne.s32.totalorder %s24, %s40
    %p42 = scmp.eq.s32.totalorder %s16, 0
    %p43 = por %p41, %p42
    %s45 = sadd.s32 %s44, 1
    %p48 = scmp.eq.s32.totalorder %s10, 1
    %p49 = scmp.ne.s32.totalorder %s44, %s46
    %p50 = scmp.eq.s32.totalorder %s10, 0
    %p51 = por %p49, %p50
    %p52 = scmp.ne.s32.totalorder %s44, %s46
    %p53 = scmp.eq.s32.totalorder %s15, 1
    %p54 = por %p52, %p53
    %p55 = scmp.ne.s32.totalorder %s46, %s47
    %p56 = scmp.eq.s32.totalorder %s15, 0
    %p57 = por %p55, %p56
    %p58 = scmp.ne.s32.totalorder %s46, %s47
    %p59 = scmp.eq.s32.totalorder %s16, 1
    %p60 = por %p58, %p59
    %p62 = scmp.ne.s32.totalorder %s47, %s61
    %p63 = scmp.eq.s32.totalorder %s16, 0
    %p64 = por %p62, %p63
    %s65 = ssub.s32 %s10, %s17
    %p66 = scmp.eq.s32.totalorder %s65, 0
    %s68 = sadd.s32 %s67, 1
    %s69 = scalar_select %p66, %s67, %s68
    %p72 = pneg %p66
    %p73 = scmp.eq.s32.totalorder %s10, 1
    %p74 = por %p72, %p73
    %p75 = scmp.ne.s32.totalorder %s67, %s70
    %p76 = scmp.eq.s32.totalorder %s10, 0
    %p77 = por %p75, %p76
    %p78 = scmp.ne.s32.totalorder %s67, %s70
    %p79 = scmp.eq.s32.totalorder %s15, 1
    %p80 = por %p78, %p79
    %p81 = scmp.ne.s32.totalorder %s70, %s71
    %p82 = scmp.eq.s32.totalorder %s15, 0
    %p83 = por %p81, %p82
    %p84 = scmp.ne.s32.totalorder %s70, %s71
    %p85 = scmp.eq.s32.totalorder %s16, 1
    %p86 = por %p84, %p85
    %p88 = scmp.ne.s32.totalorder %s71, %s87
    %p89 = scmp.eq.s32.totalorder %s16, 0
    %p90 = por %p88, %p89
    %s91 = ssub.s32 %s10, %s17
    %p92 = scmp.eq.s32.totalorder %s91, 0
    %s94 = sadd.s32 %s93, 1
    %s95 = scalar_select %p92, %s93, %s94
    %p98 = pneg %p92
    %p99 = scmp.eq.s32.totalorder %s10, 1
    %p100 = por %p98, %p99
    %p101 = scmp.ne.s32.totalorder %s93, %s96
    %p102 = scmp.eq.s32.totalorder %s10, 0
    %p103 = por %p101, %p102
    %p104 = scmp.ne.s32.totalorder %s93, %s96
    %p105 = scmp.eq.s32.totalorder %s15, 1
    %p106 = por %p104, %p105
    %p107 = scmp.ne.s32.totalorder %s96, %s97
    %p108 = scmp.eq.s32.totalorder %s15, 0
    %p109 = por %p107, %p108
    %p110 = scmp.ne.s32.totalorder %s96, %s97
    %p111 = scmp.eq.s32.totalorder %s16, 1
    %p112 = por %p110, %p111
    %p114 = scmp.ne.s32.totalorder %s97, %s113
    %p115 = scmp.eq.s32.totalorder %s16, 0
    %p116 = por %p114, %p115
    %p117 = scmp.le.s32.totalorder 1, %s10
    %p118 = scmp.lt.s32.totalorder %s10, 3
    %p119 = pnand %p117, %p118
    %p120 = pneg %p119
    // Predicated region
    $region9: #{up_forward.3} parent=5 // pred_check
      _
    $region10: #{up_forward.3} parent=5 // pred_check_branch
      %122 = sbr.rel (%p119) target = $region12
    $region11: #{up_forward.3} parent=5 // pred_region
      %s123 = ssub.s32 %s10, 1
      // Predicated region
      $region13: #{up_forward.3} parent=11 // pred_check
        %p124 = pneg %p57
      $region14: #{up_forward.3} parent=11 // pred_check_branch
        %126 = sbr.rel (%p124) target = $region16
      $region15: #{up_forward.3} parent=11 // pred_region
        _
      $region16: #{up_forward.3} parent=11 // pred_fallthru
        _
    $region12: #{up_forward.3} parent=5 // pred_fallthru
      _
    %p127 = scmp.lt.s32.totalorder %s10, 2
    // Predicated region
    $region17: #{up_forward.3} parent=5 // pred_check
      %p128 = pneg %p127
    $region18: #{up_forward.3} parent=5 // pred_check_branch
      %130 = sbr.rel (%p128) target = $region20
    $region19: #{up_forward.3} parent=5 // pred_region
      // Predicated region
      $region21: #{up_forward.3} parent=19 // pred_check
        %p131 = pneg %p30
      $region22: #{up_forward.3} parent=19 // pred_check_branch
        %133 = sbr.rel (%p131) target = $region24
      $region23: #{up_forward.3} parent=19 // pred_region
        %p134 = scmp.lt.s32.totalorder %s10, 1
        %s135 = scalar_select %p134, %s10, 1
        %s136 = smul.addr %s135, 16
        %s137 = smul.addr %s136, 4
        %s138 = scalar_lea.vmem %s0, %s137
      $region24: #{up_forward.3} parent=19 // pred_fallthru
        _
    $region20: #{up_forward.3} parent=5 // pred_fallthru
      _
    %p139 = scmp.le.s32.totalorder 1, %s10
    %p140 = scmp.lt.s32.totalorder %s10, 3
    %p141 = pnand %p139, %p140
    %p142 = pneg %p141
    // Predicated region
    $region25: #{up_forward.3} parent=5 // pred_check
      _
    $region26: #{up_forward.3} parent=5 // pred_check_branch
      %144 = sbr.rel (%p141) target = $region28
    $region27: #{up_forward.3} parent=5 // pred_region
      %s145 = ssub.s32 %s10, 1
      %p146 = scmp.lt.s32.totalorder %s15, 1
      %s147 = scalar_select %p146, %s15, 1
      %s148 = smul.addr %s147, 16
      %s149 = smul.addr %s148, 4
      %s150 = scalar_lea.vmem %s0, %s149
      %p151 = pneg %p36
      %p152 = pneg %p33
      %p153 = pneg %p57
      %p154 = pneg %p54
      %p155 = pneg %p83
      %p156 = pneg %p80
      %p157 = scmp.lt.s32.totalorder %s15, 1
      %s158 = scalar_select %p157, %s15, 1
      %s159 = smul.addr %s158, 4
      %s160 = smul.addr %s159, 8
      %s161 = scalar_lea.vmem %s2, %s160
      %p162 = pneg %p109
      %p163 = pneg %p106
      %p164 = scmp.lt.s32.totalorder %s15, 1
      %s165 = scalar_select %p164, %s15, 1
      %s166 = smul.addr %s165, 2
      %s167 = smul.addr %s166, 8
      %s168 = scalar_lea.vmem %s3, %s167
      %p169 = scmp.lt.s32.totalorder %s15, 1
      %s170 = scalar_select %p169, %s15, 1
      %s171 = smul.addr %s170, 16
      %s172 = smul.addr %s171, 4
      %s173 = scalar_lea.vmem %s0, %s172
      %p174 = scmp.lt.s32.totalorder %s15, 1
      %s175 = scalar_select %p174, %s15, 1
      %s176 = smul.addr %s175, 4
      %s177 = smul.addr %s176, 8
      %s178 = scalar_lea.vmem %s2, %s177
      %p179 = scmp.lt.s32.totalorder %s15, 1
      %s180 = scalar_select %p179, %s15, 1
      %s181 = smul.addr %s180, 2
      %s182 = smul.addr %s181, 8
      %s183 = scalar_lea.vmem %s3, %s182
      %v187 = vlaneseq
      %v188 = vand.u32 %v187, 127
      %v189 = vadd.s32 %v188, 128
      %vm190 = vcmp.lt.s32.totalorder %v188, 0
      %v191 = vsub.s32 0, %v188
      %v192 = vsel %vm190, %v191, %v188
      %v193 = vshrl.u32 %v192, 4
      %v194 = vand.u32 %v192, 15
      %v195 = vsub.s32 0, %v194
      %v196 = vsel %vm190, %v195, %v194
      %vm197 = vcmp.lt.s32.totalorder %v189, 0
      %v198 = vsub.s32 0, %v189
      %v199 = vsel %vm197, %v198, %v189
      %v200 = vshrl.u32 %v199, 4
      %v201 = vand.u32 %v199, 15
      %v202 = vsub.s32 0, %v201
      %v203 = vsel %vm197, %v202, %v201
      %vm204 = vcmp.ne.s32.totalorder %v196, 0
      %vm205 = vcmp.ne.s32.totalorder %v203, 0
      %vm206 = vcmp.lt.s32.totalorder %v196, 0
      %vm207 = vcmp.lt.s32.totalorder %v203, 0
      %vm208 = vmand %vm206, %vm204
      %vm209 = vmand %vm207, %vm205
      %v210 = vadd.s32 %v196, 16
      %v211 = vadd.s32 %v203, 16
      %v212 = vsel %vm208, %v210, %v196
      %v213 = vsel %vm209, %v211, %v203
      %vm214 = vcmp.ne.s32.totalorder %v212, 0
      %vm215 = vcmp.ne.s32.totalorder %v213, 0
      %vm216 = vcmp.ne.s32.totalorder %v212, 15
      %vm217 = vcmp.ne.s32.totalorder %v213, 15
      %v218 = vld [vmem:[%s173] sm:$0xff]
      %v219 = vld [vmem:[%s173 + $0x8] sm:$0xf]
      %v220 = vld [vmem:[%s173 + $0x10] sm:$0xff]
      %v221 = vld [vmem:[%s173 + $0x18] sm:$0xf]
      %v222 = vld [vmem:[%s173 + $0x20] sm:$0xff]
      %v223 = vld [vmem:[%s173 + $0x28] sm:$0xf]
      %v224 = vld [vmem:[%s173 + $0x30] sm:$0xff]
      %v225 = vld [vmem:[%s173 + $0x38] sm:$0xf]
      %v226 = vsel %vm214, 1, 0
      %v227 = vsel %vm215, 1, 0
      %vm228 = vcmp.eq.s32.totalorder %v226, 1
      %vm229 = vcmp.eq.s32.totalorder %v227, 1
      %vm230 = vmpackc.low %vm229, %vm228
      %v231 = vsel %vm230, 65537, 0
      %232 = vrot.lane.b32.xlu0 %v231, 111
      %v233 = vpop.permute.xlu0 %232
      %v234 = vrot.slane %v233, 4
      %vm235 = vcmask 908288
      %v236 = vsel %vm235, %v234, %v233
      %vm237 = vcmp.ne.s16.totalorder %v236, 0
      %vm238 = vcmp.ne.s16.totalorder %v234, 0
      %v239 = vsel %vm237, %v218, 0
      %v240 = vsel %vm238, %v219, 0
      %v241 = vsel %vm237, %v220, 0
      %v242 = vsel %vm238, %v221, 0
      %v243 = vsel %vm237, %v222, 0
      %v244 = vsel %vm238, %v223, 0
      %v245 = vsel %vm237, %v224, 0
      %v246 = vsel %vm238, %v225, 0
      %v255 = vunpack.c.l.b16 %v239
      %v256 = vunpack.c.h.b16 %v239
      %v257 = vunpack.c.l.b16 %v240
      %v258 = vunpack.c.l.b16 %v241
      %v259 = vunpack.c.h.b16 %v241
      %v260 = vunpack.c.l.b16 %v242
      %v261 = vunpack.c.l.b16 %v243
      %v262 = vunpack.c.h.b16 %v243
      %v263 = vunpack.c.l.b16 %v244
      %v264 = vunpack.c.l.b16 %v245
      %v265 = vunpack.c.h.b16 %v245
      %v266 = vunpack.c.l.b16 %v246
      %v267 = vpack.c.b16 %v258, %v255
      %v268 = vpack.c.b16 %v259, %v256
      %v269 = vpack.c.b16 %v260, %v257
      %v270 = vpack.c.b16 %v264, %v261
      %v271 = vpack.c.b16 %v265, %v262
      %v272 = vpack.c.b16 %v266, %v263
      %273 = vrot.lane.b32.xlu0 %v267, 17
      %v274 = vpop.permute.xlu0 %273
      %275 = vrot.lane.b32.xlu0 %v268, 17
      %v276 = vpop.permute.xlu0 %275
      %277 = vrot.lane.b32.xlu0 %v269, 17
      %v278 = vpop.permute.xlu0 %277
      %279 = vrot.lane.b32.xlu0 %v270, 17
      %v280 = vpop.permute.xlu0 %279
      %281 = vrot.lane.b32.xlu0 %v271, 17
      %v282 = vpop.permute.xlu0 %281
      %283 = vrot.lane.b32.xlu0 %v272, 17
      %v284 = vpop.permute.xlu0 %283
      %vm285 = vcmask 138240
      %v286 = vsel %vm285, %v274, %v276
      %v287 = vsel %vm285, %v276, %v278
      %v288 = vsel %vm285, %v280, %v282
      %v289 = vsel %vm285, %v282, %v284
      %294 = vst [vmem:[#allocation2] sm:$0xff] %v286
      %295 = vst [vmem:[#allocation2 + $0x8] sm:$0xff] %v287
      %296 = vst [vmem:[#allocation2 + $0x10] sm:$0xff] %v288
      %297 = vst [vmem:[#allocation2 + $0x18] sm:$0xff] %v289
      %v298 = vld [vmem:[%s173] sm:$0xff]
      %v299 = vld [vmem:[%s173 + $0x8] sm:$0xf]
      %v300 = vld [vmem:[%s173 + $0x10] sm:$0xff]
      %v301 = vld [vmem:[%s173 + $0x18] sm:$0xf]
      %v302 = vld [vmem:[%s173 + $0x20] sm:$0xff]
      %v303 = vld [vmem:[%s173 + $0x28] sm:$0xf]
      %v304 = vld [vmem:[%s173 + $0x30] sm:$0xff]
      %v305 = vld [vmem:[%s173 + $0x38] sm:$0xf]
      %v314 = vunpack.c.l.b16 %v298
      %v315 = vunpack.c.h.b16 %v298
      %v316 = vunpack.c.l.b16 %v299
      %v317 = vunpack.c.l.b16 %v300
      %v318 = vunpack.c.h.b16 %v300
      %v319 = vunpack.c.l.b16 %v301
      %v320 = vunpack.c.l.b16 %v302
      %v321 = vunpack.c.h.b16 %v302
      %v322 = vunpack.c.l.b16 %v303
      %v323 = vunpack.c.l.b16 %v304
      %v324 = vunpack.c.h.b16 %v304
      %v325 = vunpack.c.l.b16 %v305
      %v326 = vpack.c.b16 %v317, %v314
      %v327 = vpack.c.b16 %v318, %v315
      %v328 = vpack.c.b16 %v319, %v316
      %v329 = vpack.c.b16 %v323, %v320
      %v330 = vpack.c.b16 %v324, %v321
      %v331 = vpack.c.b16 %v325, %v322
      %332 = vrot.lane.b32.xlu0 %v326, 16
      %v333 = vpop.permute.xlu0 %332
      %334 = vrot.lane.b32.xlu0 %v327, 16
      %v335 = vpop.permute.xlu0 %334
      %336 = vrot.lane.b32.xlu0 %v328, 16
      %v337 = vpop.permute.xlu0 %336
      %338 = vrot.lane.b32.xlu0 %v329, 16
      %v339 = vpop.permute.xlu0 %338
      %340 = vrot.lane.b32.xlu0 %v330, 16
      %v341 = vpop.permute.xlu0 %340
      %342 = vrot.lane.b32.xlu0 %v331, 16
      %v343 = vpop.permute.xlu0 %342
      %vm344 = vcmask 130048
      %v345 = vsel %vm344, %v333, %v335
      %v346 = vsel %vm344, %v335, %v337
      %v347 = vsel %vm344, %v339, %v341
      %v348 = vsel %vm344, %v341, %v343
      %353 = vst [vmem:[#allocation2 + $0x20] sm:$0xff] %v345
      %354 = vst [vmem:[#allocation2 + $0x28] sm:$0xff] %v346
      %355 = vst [vmem:[#allocation2 + $0x30] sm:$0xff] %v347
      %356 = vst [vmem:[#allocation2 + $0x38] sm:$0xff] %v348
      %v357 = vld [vmem:[%s173] sm:$0xff]
      %v358 = vld [vmem:[%s173 + $0x8] sm:$0xf]
      %v359 = vld [vmem:[%s173 + $0x10] sm:$0xff]
      %v360 = vld [vmem:[%s173 + $0x18] sm:$0xf]
      %v361 = vld [vmem:[%s173 + $0x20] sm:$0xff]
      %v362 = vld [vmem:[%s173 + $0x28] sm:$0xf]
      %v363 = vld [vmem:[%s173 + $0x30] sm:$0xff]
      %v364 = vld [vmem:[%s173 + $0x38] sm:$0xf]
      %v365 = vsel %vm216, 1, 0
      %v366 = vsel %vm217, 1, 0
      %vm367 = vcmp.eq.s32.totalorder %v365, 1
      %vm368 = vcmp.eq.s32.totalorder %v366, 1
      %vm369 = vmpackc.low %vm368, %vm367
      %v370 = vsel %vm369, 65537, 0
      %371 = vrot.lane.b32.xlu0 %v370, 113
      %v372 = vpop.permute.xlu0 %371
      %v373 = vrot.slane %v372, 4
      %vm374 = vcmask 924672
      %v375 = vsel %vm374, %v373, %v372
      %vm376 = vcmp.ne.s16.totalorder %v375, 0
      %vm377 = vcmp.ne.s16.totalorder %v373, 0
      %v378 = vsel %vm376, %v357, 0
      %v379 = vsel %vm377, %v358, 0
      %v380 = vsel %vm376, %v359, 0
      %v381 = vsel %vm377, %v360, 0
      %v382 = vsel %vm376, %v361, 0
      %v383 = vsel %vm377, %v362, 0
      %v384 = vsel %vm376, %v363, 0
      %v385 = vsel %vm377, %v364, 0
      %v394 = vunpack.c.l.b16 %v378
      %v395 = vunpack.c.h.b16 %v378
      %v396 = vunpack.c.l.b16 %v379
      %v397 = vunpack.c.l.b16 %v380
      %v398 = vunpack.c.h.b16 %v380
      %v399 = vunpack.c.l.b16 %v381
      %v400 = vunpack.c.l.b16 %v382
      %v401 = vunpack.c.h.b16 %v382
      %v402 = vunpack.c.l.b16 %v383
      %v403 = vunpack.c.l.b16 %v384
      %v404 = vunpack.c.h.b16 %v384
      %v405 = vunpack.c.l.b16 %v385
      %v406 = vpack.c.b16 %v397, %v394
      %v407 = vpack.c.b16 %v398, %v395
      %v408 = vpack.c.b16 %v399, %v396
      %v409 = vpack.c.b16 %v403, %v400
      %v410 = vpack.c.b16 %v404, %v401
      %v411 = vpack.c.b16 %v405, %v402
      %412 = vrot.lane.b32.xlu0 %v406, 15
      %v413 = vpop.permute.xlu0 %412
      %414 = vrot.lane.b32.xlu0 %v407, 15
      %v415 = vpop.permute.xlu0 %414
      %416 = vrot.lane.b32.xlu0 %v408, 15
      %v417 = vpop.permute.xlu0 %416
      %418 = vrot.lane.b32.xlu0 %v409, 15
      %v419 = vpop.permute.xlu0 %418
      %420 = vrot.lane.b32.xlu0 %v410, 15
      %v421 = vpop.permute.xlu0 %420
      %422 = vrot.lane.b32.xlu0 %v411, 15
      %v423 = vpop.permute.xlu0 %422
      %vm424 = vcmask 121856
      %v425 = vsel %vm424, %v413, %v415
      %v426 = vsel %vm424, %v415, %v417
      %v427 = vsel %vm424, %v419, %v421
      %v428 = vsel %vm424, %v421, %v423
      %433 = vst [vmem:[#allocation2 + $0x40] sm:$0xff] %v425
      %434 = vst [vmem:[#allocation2 + $0x48] sm:$0xff] %v426
      %435 = vst [vmem:[#allocation2 + $0x50] sm:$0xff] %v427
      %436 = vst [vmem:[#allocation2 + $0x58] sm:$0xff] %v428
      %v437 = vld [vmem:[%s173] sm:$0xff]
      %v438 = vld [vmem:[%s173 + $0x8] sm:$0xf]
      %v439 = vld [vmem:[%s173 + $0x10] sm:$0xff]
      %v440 = vld [vmem:[%s173 + $0x18] sm:$0xf]
      %v441 = vld [vmem:[%s173 + $0x20] sm:$0xff]
      %v442 = vld [vmem:[%s173 + $0x28] sm:$0xf]
      %v443 = vld [vmem:[%s173 + $0x30] sm:$0xff]
      %v444 = vld [vmem:[%s173 + $0x38] sm:$0xf]
      %445 = vrot.lane.b32.xlu0 %v231, 127
      %v446 = vpop.permute.xlu0 %445
      %v447 = vrot.slane %v446, 4
      %vm448 = vcmask 1039360
      %v449 = vsel %vm448, %v447, %v446
      %vm450 = vcmp.ne.s16.totalorder %v449, 0
      %vm451 = vcmp.ne.s16.totalorder %v447, 0
      %v452 = vsel %vm450, %v437, 0
      %v453 = vsel %vm451, %v438, 0
      %v454 = vsel %vm450, %v439, 0
      %v455 = vsel %vm451, %v440, 0
      %v456 = vsel %vm450, %v441, 0
      %v457 = vsel %vm451, %v442, 0
      %v458 = vsel %vm450, %v443, 0
      %v459 = vsel %vm451, %v444, 0
      %v468 = vunpack.c.l.b16 %v452
      %v469 = vunpack.c.h.b16 %v452
      %v470 = vunpack.c.l.b16 %v453
      %v471 = vunpack.c.l.b16 %v454
      %v472 = vunpack.c.h.b16 %v454
      %v473 = vunpack.c.l.b16 %v455
      %v474 = vunpack.c.l.b16 %v456
      %v475 = vunpack.c.h.b16 %v456
      %v476 = vunpack.c.l.b16 %v457
      %v477 = vunpack.c.l.b16 %v458
      %v478 = vunpack.c.h.b16 %v458
      %v479 = vunpack.c.l.b16 %v459
      %v480 = vpack.c.b16 %v471, %v468
      %v481 = vpack.c.b16 %v472, %v469
      %v482 = vpack.c.b16 %v473, %v470
      %v483 = vpack.c.b16 %v477, %v474
      %v484 = vpack.c.b16 %v478, %v475
      %v485 = vpack.c.b16 %v479, %v476
      %486 = vrot.lane.b32.xlu0 %v480, 1
      %v487 = vpop.permute.xlu0 %486
      %488 = vrot.lane.b32.xlu0 %v481, 1
      %v489 = vpop.permute.xlu0 %488
      %490 = vrot.lane.b32.xlu0 %v482, 1
      %v491 = vpop.permute.xlu0 %490
      %492 = vrot.lane.b32.xlu0 %v483, 1
      %v493 = vpop.permute.xlu0 %492
      %494 = vrot.lane.b32.xlu0 %v484, 1
      %v495 = vpop.permute.xlu0 %494
      %496 = vrot.lane.b32.xlu0 %v485, 1
      %v497 = vpop.permute.xlu0 %496
      %vm498 = vcmask 7168
      %v499 = vsel %vm498, %v487, %v489
      %v500 = vsel %vm498, %v489, %v491
      %v501 = vsel %vm498, %v493, %v495
      %v502 = vsel %vm498, %v495, %v497
      %507 = vst [vmem:[#allocation2 + $0x60] sm:$0xff] %v499
      %508 = vst [vmem:[#allocation2 + $0x68] sm:$0xff] %v500
      %509 = vst [vmem:[#allocation2 + $0x70] sm:$0xff] %v501
      %510 = vst [vmem:[#allocation2 + $0x78] sm:$0xff] %v502
      %v511 = vld [vmem:[%s173 + $0x4] sm:$0xff]
      %v512 = vld [vmem:[%s173 + $0x14] sm:$0xff]
      %v513 = vld [vmem:[%s173 + $0x24] sm:$0xff]
      %v514 = vld [vmem:[%s173 + $0x34] sm:$0xff]
      %v519 = vunpack.c.l.b16 %v511
      %v520 = vunpack.c.h.b16 %v511
      %v521 = vunpack.c.l.b16 %v512
      %v522 = vunpack.c.h.b16 %v512
      %v523 = vunpack.c.l.b16 %v513
      %v524 = vunpack.c.h.b16 %v513
      %v525 = vunpack.c.l.b16 %v514
      %v526 = vunpack.c.h.b16 %v514
      %v527 = vpack.c.b16 %v521, %v519
      %v528 = vpack.c.b16 %v522, %v520
      %v529 = vpack.c.b16 %v525, %v523
      %v530 = vpack.c.b16 %v526, %v524
      %535 = vst [vmem:[#allocation2 + $0x80] sm:$0xff] %v527
      %536 = vst [vmem:[#allocation2 + $0x88] sm:$0xff] %v528
      %537 = vst [vmem:[#allocation2 + $0x90] sm:$0xff] %v529
      %538 = vst [vmem:[#allocation2 + $0x98] sm:$0xff] %v530
      %v539 = vld [vmem:[%s173 + $0x4] sm:$0xff]
      %v540 = vld [vmem:[%s173 + $0xc] sm:$0xf]
      %v541 = vld [vmem:[%s173 + $0x14] sm:$0xff]
      %v542 = vld [vmem:[%s173 + $0x1c] sm:$0xf]
      %v543 = vld [vmem:[%s173 + $0x24] sm:$0xff]
      %v544 = vld [vmem:[%s173 + $0x2c] sm:$0xf]
      %v545 = vld [vmem:[%s173 + $0x34] sm:$0xff]
      %v546 = vld [vmem:[%s173 + $0x3c] sm:$0xf]
      %547 = vrot.lane.b32.xlu0 %v370, 1
      %v548 = vpop.permute.xlu0 %547
      %v549 = vrot.slane %v548, 4
      %v550 = vsel %vm498, %v549, %v548
      %vm551 = vcmp.ne.s16.totalorder %v550, 0
      %vm552 = vcmp.ne.s16.totalorder %v549, 0
      %v553 = vsel %vm551, %v539, 0
      %v554 = vsel %vm552, %v540, 0
      %v555 = vsel %vm551, %v541, 0
      %v556 = vsel %vm552, %v542, 0
      %v557 = vsel %vm551, %v543, 0
      %v558 = vsel %vm552, %v544, 0
      %v559 = vsel %vm551, %v545, 0
      %v560 = vsel %vm552, %v546, 0
      %v569 = vunpack.c.l.b16 %v553
      %v570 = vunpack.c.h.b16 %v553
      %v571 = vunpack.c.l.b16 %v554
      %v572 = vunpack.c.l.b16 %v555
      %v573 = vunpack.c.h.b16 %v555
      %v574 = vunpack.c.l.b16 %v556
      %v575 = vunpack.c.l.b16 %v557
      %v576 = vunpack.c.h.b16 %v557
      %v577 = vunpack.c.l.b16 %v558
      %v578 = vunpack.c.l.b16 %v559
      %v579 = vunpack.c.h.b16 %v559
      %v580 = vunpack.c.l.b16 %v560
      %v581 = vpack.c.b16 %v572, %v569
      %v582 = vpack.c.b16 %v573, %v570
      %v583 = vpack.c.b16 %v574, %v571
      %v584 = vpack.c.b16 %v578, %v575
      %v585 = vpack.c.b16 %v579, %v576
      %v586 = vpack.c.b16 %v580, %v577
      %587 = vrot.lane.b32.xlu0 %v581, 127
      %v588 = vpop.permute.xlu0 %587
      %589 = vrot.lane.b32.xlu0 %v582, 127
      %v590 = vpop.permute.xlu0 %589
      %591 = vrot.lane.b32.xlu0 %v583, 127
      %v592 = vpop.permute.xlu0 %591
      %593 = vrot.lane.b32.xlu0 %v584, 127
      %v594 = vpop.permute.xlu0 %593
      %595 = vrot.lane.b32.xlu0 %v585, 127
      %v596 = vpop.permute.xlu0 %595
      %597 = vrot.lane.b32.xlu0 %v586, 127
      %v598 = vpop.permute.xlu0 %597
      %v599 = vsel %vm448, %v588, %v590
      %v600 = vsel %vm448, %v590, %v592
      %v601 = vsel %vm448, %v594, %v596
      %v602 = vsel %vm448, %v596, %v598
      %607 = vst [vmem:[#allocation2 + $0xa0] sm:$0xff] %v599
      %608 = vst [vmem:[#allocation2 + $0xa8] sm:$0xff] %v600
      %609 = vst [vmem:[#allocation2 + $0xb0] sm:$0xff] %v601
      %610 = vst [vmem:[#allocation2 + $0xb8] sm:$0xff] %v602
      %v611 = vld [vmem:[%s173 + $0x4] sm:$0xff]
      %v612 = vld [vmem:[%s173 + $0xc] sm:$0xf]
      %v613 = vld [vmem:[%s173 + $0x14] sm:$0xff]
      %v614 = vld [vmem:[%s173 + $0x1c] sm:$0xf]
      %v615 = vld [vmem:[%s173 + $0x24] sm:$0xff]
      %v616 = vld [vmem:[%s173 + $0x2c] sm:$0xf]
      %v617 = vld [vmem:[%s173 + $0x34] sm:$0xff]
      %v618 = vld [vmem:[%s173 + $0x3c] sm:$0xf]
      %619 = vrot.lane.b32.xlu0 %v231, 15
      %v620 = vpop.permute.xlu0 %619
      %v621 = vrot.slane %v620, 4
      %v622 = vsel %vm424, %v621, %v620
      %vm623 = vcmp.ne.s16.totalorder %v622, 0
      %vm624 = vcmp.ne.s16.totalorder %v621, 0
      %v625 = vsel %vm623, %v611, 0
      %v626 = vsel %vm624, %v612, 0
      %v627 = vsel %vm623, %v613, 0
      %v628 = vsel %vm624, %v614, 0
      %v629 = vsel %vm623, %v615, 0
      %v630 = vsel %vm624, %v616, 0
      %v631 = vsel %vm623, %v617, 0
      %v632 = vsel %vm624, %v618, 0
      %v641 = vunpack.c.l.b16 %v625
      %v642 = vunpack.c.h.b16 %v625
      %v643 = vunpack.c.l.b16 %v626
      %v644 = vunpack.c.l.b16 %v627
      %v645 = vunpack.c.h.b16 %v627
      %v646 = vunpack.c.l.b16 %v628
      %v647 = vunpack.c.l.b16 %v629
      %v648 = vunpack.c.h.b16 %v629
      %v649 = vunpack.c.l.b16 %v630
      %v650 = vunpack.c.l.b16 %v631
      %v651 = vunpack.c.h.b16 %v631
      %v652 = vunpack.c.l.b16 %v632
      %v653 = vpack.c.b16 %v644, %v641
      %v654 = vpack.c.b16 %v645, %v642
      %v655 = vpack.c.b16 %v646, %v643
      %v656 = vpack.c.b16 %v650, %v647
      %v657 = vpack.c.b16 %v651, %v648
      %v658 = vpack.c.b16 %v652, %v649
      %659 = vrot.lane.b32.xlu0 %v653, 113
      %v660 = vpop.permute.xlu0 %659
      %661 = vrot.lane.b32.xlu0 %v654, 113
      %v662 = vpop.permute.xlu0 %661
      %663 = vrot.lane.b32.xlu0 %v655, 113
      %v664 = vpop.permute.xlu0 %663
      %665 = vrot.lane.b32.xlu0 %v656, 113
      %v666 = vpop.permute.xlu0 %665
      %667 = vrot.lane.b32.xlu0 %v657, 113
      %v668 = vpop.permute.xlu0 %667
      %669 = vrot.lane.b32.xlu0 %v658, 113
      %v670 = vpop.permute.xlu0 %669
      %v671 = vsel %vm374, %v660, %v662
      %v672 = vsel %vm374, %v662, %v664
      %v673 = vsel %vm374, %v666, %v668
      %v674 = vsel %vm374, %v668, %v670
      %679 = vst [vmem:[#allocation2 + $0xc0] sm:$0xff] %v671
      %680 = vst [vmem:[#allocation2 + $0xc8] sm:$0xff] %v672
      %681 = vst [vmem:[#allocation2 + $0xd0] sm:$0xff] %v673
      %682 = vst [vmem:[#allocation2 + $0xd8] sm:$0xff] %v674
      %v683 = vld [vmem:[%s173 + $0x4] sm:$0xff]
      %v684 = vld [vmem:[%s173 + $0xc] sm:$0xf]
      %v685 = vld [vmem:[%s173 + $0x14] sm:$0xff]
      %v686 = vld [vmem:[%s173 + $0x1c] sm:$0xf]
      %v687 = vld [vmem:[%s173 + $0x24] sm:$0xff]
      %v688 = vld [vmem:[%s173 + $0x2c] sm:$0xf]
      %v689 = vld [vmem:[%s173 + $0x34] sm:$0xff]
      %v690 = vld [vmem:[%s173 + $0x3c] sm:$0xf]
      %v699 = vunpack.c.l.b16 %v683
      %v700 = vunpack.c.h.b16 %v683
      %v701 = vunpack.c.l.b16 %v684
      %v702 = vunpack.c.l.b16 %v685
      %v703 = vunpack.c.h.b16 %v685
      %v704 = vunpack.c.l.b16 %v686
      %v705 = vunpack.c.l.b16 %v687
      %v706 = vunpack.c.h.b16 %v687
      %v707 = vunpack.c.l.b16 %v688
      %v708 = vunpack.c.l.b16 %v689
      %v709 = vunpack.c.h.b16 %v689
      %v710 = vunpack.c.l.b16 %v690
      %v711 = vpack.c.b16 %v702, %v699
      %v712 = vpack.c.b16 %v703, %v700
      %v713 = vpack.c.b16 %v704, %v701
      %v714 = vpack.c.b16 %v708, %v705
      %v715 = vpack.c.b16 %v709, %v706
      %v716 = vpack.c.b16 %v710, %v707
      %717 = vrot.lane.b32.xlu0 %v711, 112
      %v718 = vpop.permute.xlu0 %717
      %719 = vrot.lane.b32.xlu0 %v712, 112
      %v720 = vpop.permute.xlu0 %719
      %721 = vrot.lane.b32.xlu0 %v713, 112
      %v722 = vpop.permute.xlu0 %721
      %723 = vrot.lane.b32.xlu0 %v714, 112
      %v724 = vpop.permute.xlu0 %723
      %725 = vrot.lane.b32.xlu0 %v715, 112
      %v726 = vpop.permute.xlu0 %725
      %727 = vrot.lane.b32.xlu0 %v716, 112
      %v728 = vpop.permute.xlu0 %727
      %vm729 = vcmask 916480
      %v730 = vsel %vm729, %v718, %v720
      %v731 = vsel %vm729, %v720, %v722
      %v732 = vsel %vm729, %v724, %v726
      %v733 = vsel %vm729, %v726, %v728
      %738 = vst [vmem:[#allocation2 + $0xe0] sm:$0xff] %v730
      %739 = vst [vmem:[#allocation2 + $0xe8] sm:$0xff] %v731
      %740 = vst [vmem:[#allocation2 + $0xf0] sm:$0xff] %v732
      %741 = vst [vmem:[#allocation2 + $0xf8] sm:$0xff] %v733
      %v742 = vld [vmem:[%s173 + $0x4] sm:$0xff]
      %v743 = vld [vmem:[%s173 + $0xc] sm:$0xf]
      %v744 = vld [vmem:[%s173 + $0x14] sm:$0xff]
      %v745 = vld [vmem:[%s173 + $0x1c] sm:$0xf]
      %v746 = vld [vmem:[%s173 + $0x24] sm:$0xff]
      %v747 = vld [vmem:[%s173 + $0x2c] sm:$0xf]
      %v748 = vld [vmem:[%s173 + $0x34] sm:$0xff]
      %v749 = vld [vmem:[%s173 + $0x3c] sm:$0xf]
      %750 = vrot.lane.b32.xlu0 %v370, 17
      %v751 = vpop.permute.xlu0 %750
      %v752 = vrot.slane %v751, 4
      %v753 = vsel %vm285, %v752, %v751
      %vm754 = vcmp.ne.s16.totalorder %v753, 0
      %vm755 = vcmp.ne.s16.totalorder %v752, 0
      %v756 = vsel %vm754, %v742, 0
      %v757 = vsel %vm755, %v743, 0
      %v758 = vsel %vm754, %v744, 0
      %v759 = vsel %vm755, %v745, 0
      %v760 = vsel %vm754, %v746, 0
      %v761 = vsel %vm755, %v747, 0
      %v762 = vsel %vm754, %v748, 0
      %v763 = vsel %vm755, %v749, 0
      %v772 = vunpack.c.l.b16 %v756
      %v773 = vunpack.c.h.b16 %v756
      %v774 = vunpack.c.l.b16 %v757
      %v775 = vunpack.c.l.b16 %v758
      %v776 = vunpack.c.h.b16 %v758
      %v777 = vunpack.c.l.b16 %v759
      %v778 = vunpack.c.l.b16 %v760
      %v779 = vunpack.c.h.b16 %v760
      %v780 = vunpack.c.l.b16 %v761
      %v781 = vunpack.c.l.b16 %v762
      %v782 = vunpack.c.h.b16 %v762
      %v783 = vunpack.c.l.b16 %v763
      %v784 = vpack.c.b16 %v775, %v772
      %v785 = vpack.c.b16 %v776, %v773
      %v786 = vpack.c.b16 %v777, %v774
      %v787 = vpack.c.b16 %v781, %v778
      %v788 = vpack.c.b16 %v782, %v779
      %v789 = vpack.c.b16 %v783, %v780
      %790 = vrot.lane.b32.xlu0 %v784, 111
      %v791 = vpop.permute.xlu0 %790
      %792 = vrot.lane.b32.xlu0 %v785, 111
      %v793 = vpop.permute.xlu0 %792
      %794 = vrot.lane.b32.xlu0 %v786, 111
      %v795 = vpop.permute.xlu0 %794
      %796 = vrot.lane.b32.xlu0 %v787, 111
      %v797 = vpop.permute.xlu0 %796
      %798 = vrot.lane.b32.xlu0 %v788, 111
      %v799 = vpop.permute.xlu0 %798
      %800 = vrot.lane.b32.xlu0 %v789, 111
      %v801 = vpop.permute.xlu0 %800
      %v802 = vsel %vm235, %v791, %v793
      %v803 = vsel %vm235, %v793, %v795
      %v804 = vsel %vm235, %v797, %v799
      %v805 = vsel %vm235, %v799, %v801
      %810 = vst [vmem:[#allocation2 + $0x100] sm:$0xff] %v802
      %811 = vst [vmem:[#allocation2 + $0x108] sm:$0xff] %v803
      %812 = vst [vmem:[#allocation2 + $0x110] sm:$0xff] %v804
      %813 = vst [vmem:[#allocation2 + $0x118] sm:$0xff] %v805
      %v814 = vld [vmem:[%s1] sm:$0xff]
      %v815 = vld [vmem:[%s1 + $0x8] sm:$0xf]
      %v816 = vld [vmem:[%s1 + $0xc] sm:$0xff]
      %v817 = vld [vmem:[%s1 + $0x14] sm:$0xf]
      %v818 = vld [vmem:[#allocation2] sm:$0xff]
      %v819 = vld [vmem:[#allocation2 + $0x8] sm:$0xff]
      %v820 = vld [vmem:[#allocation2 + $0x10] sm:$0xff]
      %v821 = vld [vmem:[#allocation2 + $0x18] sm:$0xff]
      %v822 = vld [vmem:[#allocation2 + $0x20] sm:$0xff]
      %v823 = vld [vmem:[#allocation2 + $0x28] sm:$0xff]
      %v824 = vld [vmem:[#allocation2 + $0x30] sm:$0xff]
      %v825 = vld [vmem:[#allocation2 + $0x38] sm:$0xff]
      %v826 = vld [vmem:[#allocation2 + $0x40] sm:$0xff]
      %v827 = vld [vmem:[#allocation2 + $0x48] sm:$0xff]
      %v828 = vld [vmem:[#allocation2 + $0x50] sm:$0xff]
      %v829 = vld [vmem:[#allocation2 + $0x58] sm:$0xff]
      %v830 = vld [vmem:[#allocation2 + $0x60] sm:$0xff]
      %v831 = vld [vmem:[#allocation2 + $0x68] sm:$0xff]
      %v832 = vld [vmem:[#allocation2 + $0x70] sm:$0xff]
      %v833 = vld [vmem:[#allocation2 + $0x78] sm:$0xff]
      %v834 = vld [vmem:[#allocation2 + $0x80] sm:$0xff]
      %v835 = vld [vmem:[#allocation2 + $0x88] sm:$0xff]
      %v836 = vld [vmem:[#allocation2 + $0x90] sm:$0xff]
      %v837 = vld [vmem:[#allocation2 + $0x98] sm:$0xff]
      %v838 = vld [vmem:[#allocation2 + $0xa0] sm:$0xff]
      %v839 = vld [vmem:[#allocation2 + $0xa8] sm:$0xff]
      %v840 = vld [vmem:[#allocation2 + $0xb0] sm:$0xff]
      %v841 = vld [vmem:[#allocation2 + $0xb8] sm:$0xff]
      %v842 = vld [vmem:[#allocation2 + $0xc0] sm:$0xff]
      %v843 = vld [vmem:[#allocation2 + $0xc8] sm:$0xff]
      %v844 = vld [vmem:[#allocation2 + $0xd0] sm:$0xff]
      %v845 = vld [vmem:[#allocation2 + $0xd8] sm:$0xff]
      %v846 = vld [vmem:[#allocation2 + $0xe0] sm:$0xff]
      %v847 = vld [vmem:[#allocation2 + $0xe8] sm:$0xff]
      %v848 = vld [vmem:[#allocation2 + $0xf0] sm:$0xff]
      %v849 = vld [vmem:[#allocation2 + $0xf8] sm:$0xff]
      %v850 = vld [vmem:[#allocation2 + $0x100] sm:$0xff]
      %v851 = vld [vmem:[#allocation2 + $0x108] sm:$0xff]
      %v852 = vld [vmem:[#allocation2 + $0x110] sm:$0xff]
      %v853 = vld [vmem:[#allocation2 + $0x118] sm:$0xff]
      %v858 = vunpack.c.l.b16 %v814
      %v859 = vunpack.c.h.b16 %v814
      %v860 = vunpack.c.l.b16 %v815
      %v861 = vunpack.c.l.b16 %v816
      %v862 = vunpack.c.h.b16 %v816
      %v863 = vunpack.c.l.b16 %v817
      %v864 = vpack.c.b16 %v861, %v858
      %v865 = vpack.c.b16 %v862, %v859
      %v866 = vpack.c.b16 %v863, %v860
      %vm869 = vcmask 261120
      %v871 = vsel %vm869, %v866, 0
      %873 = vmatprep.subr.bf16.mxu0 %v819
      %874 = vmatpush1.bf16.msra.mxu0 %v818
      %875 = vmatprep.subr.bf16.mxu0 %v821
      %876 = vmatpush1.bf16.msra.mxu0 %v820
      %877 = vmatprep.subr.bf16.mxu0 %v823
      %878 = vmatpush1.bf16.msra.mxu0 %v822
      %879 = vmatprep.subr.bf16.mxu0 %v825
      %880 = vmatpush1.bf16.msra.mxu0 %v824
      %881 = vmatprep.subr.bf16.mxu0 %v827
      %882 = vmatpush1.bf16.msra.mxu0 %v826
      %883 = vmatprep.subr.bf16.mxu0 %v829
      %884 = vmatpush1.bf16.msra.mxu0 %v828
      %885 = vmatprep.subr.bf16.mxu0 %v831
      %886 = vmatpush1.bf16.msra.mxu0 %v830
      %887 = vmatprep.subr.bf16.mxu0 %v833
      %888 = vmatpush1.bf16.msra.mxu0 %v832
      %889 = vmatprep.subr.bf16.mxu0 %v835
      %890 = vmatpush1.bf16.msra.mxu0 %v834
      %891 = vmatprep.subr.bf16.mxu0 %v837
      %892 = vmatpush1.bf16.msra.mxu0 %v836
      %893 = vmatprep.subr.bf16.mxu0 %v839
      %894 = vmatpush1.bf16.msra.mxu0 %v838
      %895 = vmatprep.subr.bf16.mxu0 %v841
      %896 = vmatpush1.bf16.msra.mxu0 %v840
      %897 = vmatprep.subr.bf16.mxu0 %v843
      %898 = vmatpush1.bf16.msra.mxu0 %v842
      %899 = vmatprep.subr.bf16.mxu0 %v845
      %900 = vmatpush1.bf16.msra.mxu0 %v844
      %901 = vmatprep.subr.bf16.mxu0 %v847
      %902 = vmatpush1.bf16.msra.mxu0 %v846
      %903 = vmatprep.subr.bf16.mxu0 %v849
      %904 = vmatpush1.bf16.msra.mxu0 %v848
      %905 = vmatprep.mubr.bf16.mxu0 %v865
      %906 = vmatmul.mubr.bf16.gmra.mrb[0].mxu0 %v864
      %v907 = vpop.f32.mrb[0].mxu0
      %v908 = vadd.f32 0.0, %v907
      %v909 = vpop.f32.mrb[0].mxu0
      %v910 = vadd.f32 0.0, %v909
      %v911 = vpop.f32.mrb[0].mxu0
      %v912 = vadd.f32 0.0, %v911
      %v913 = vpop.f32.mrb[0].mxu0
      %v914 = vadd.f32 0.0, %v913
      %915 = vdwg.mxu0
      %916 = vmatprep.subr.bf16.mxu0 %v851
      %917 = vmatpush1.bf16.msra.mxu0 %v850
      %918 = vmatprep.subr.bf16.mxu0 %v853
      %919 = vmatpush1.bf16.msra.mxu0 %v852
      %920 = vmatprep.subr.bf16.mxu0 0
      %921 = vmatpush1.bf16.msra.mxu0 0
      %922 = vmatprep.subr.bf16.mxu0 0
      %923 = vmatpush1.bf16.msra.mxu0 0
      %924 = vmatprep.subr.bf16.mxu0 0
      %925 = vmatpush1.bf16.msra.mxu0 0
      %926 = vmatprep.subr.bf16.mxu0 0
      %927 = vmatpush1.bf16.msra.mxu0 0
      %928 = vmatprep.subr.bf16.mxu0 0
      %929 = vmatpush1.bf16.msra.mxu0 0
      %930 = vmatprep.subr.bf16.mxu0 0
      %931 = vmatpush1.bf16.msra.mxu0 0
      %932 = vmatprep.subr.bf16.mxu0 0
      %933 = vmatpush1.bf16.msra.mxu0 0
      %934 = vmatprep.subr.bf16.mxu0 0
      %935 = vmatpush1.bf16.msra.mxu0 0
      %936 = vmatprep.subr.bf16.mxu0 0
      %937 = vmatpush1.bf16.msra.mxu0 0
      %938 = vmatprep.subr.bf16.mxu0 0
      %939 = vmatpush1.bf16.msra.mxu0 0
      %940 = vmatprep.subr.bf16.mxu0 0
      %941 = vmatpush1.bf16.msra.mxu0 0
      %942 = vmatprep.subr.bf16.mxu0 0
      %943 = vmatpush1.bf16.msra.mxu0 0
      %944 = vmatprep.subr.bf16.mxu0 0
      %945 = vmatpush1.bf16.msra.mxu0 0
      %946 = vmatprep.subr.bf16.mxu0 0
      %947 = vmatpush1.bf16.msra.mxu0 0
      %948 = vmatprep.mubr.bf16.mxu0 0
      %949 = vmatmul.mubr.bf16.gmra.mrb[0].mxu0 %v871
      %v950 = vpop.f32.mrb[0].mxu0
      %v951 = vadd.f32 %v908, %v950
      %v952 = vpop.f32.mrb[0].mxu0
      %v953 = vadd.f32 %v910, %v952
      %v954 = vpop.f32.mrb[0].mxu0
      %v955 = vadd.f32 %v912, %v954
      %v956 = vpop.f32.mrb[0].mxu0
      %v957 = vadd.f32 %v914, %v956
      %958 = vdwg.mxu0
      %959 = vst [vmem:[%s178] sm:$0xff] %v951
      %960 = vst [vmem:[%s178 + $0x8] sm:$0xff] %v953
      %961 = vst [vmem:[%s178 + $0x10] sm:$0xff] %v955
      %962 = vst [vmem:[%s178 + $0x18] sm:$0xff] %v957
      %v963 = vadd.f32 %v951, %v953
      %964 = vadd.xlane.f32.xlu0 %v963
      %v965 = vpop.xlane.xlu0 %964
      %v966 = vadd.f32 %v955, %v957
      %967 = vadd.xlane.f32.xlu0 %v966
      %v968 = vpop.xlane.xlu0 %967
      %vm969 = vcmask 7168
      %970 = vst.msk [vmem:[%s183] sm:$0xff] %vm969, %v965
      %971 = vst.msk [vmem:[%s183 + $0x8] sm:$0xff] %vm969, %v968
      %v972 = vmul.f32 %v951, %v951
      %v973 = vmul.f32 %v953, %v953
      %v974 = vmul.f32 %v955, %v955
      %v975 = vmul.f32 %v957, %v957
      %v976 = vadd.f32 %v972, %v973
      %977 = vadd.xlane.f32.xlu0 %v976
      %v978 = vpop.xlane.xlu0 %977
      %v979 = vadd.f32 %v974, %v975
      %980 = vadd.xlane.f32.xlu0 %v979
      %v981 = vpop.xlane.xlu0 %980
      %vm982 = vcmask 15368
      %983 = vst.msk [vmem:[%s183] sm:$0xff] %vm982, %v978
      %984 = vst.msk [vmem:[%s183 + $0x8] sm:$0xff] %vm982, %v981
      %p985 = scmp.lt.s32.totalorder %s15, 1
      %s986 = scalar_select %p985, %s15, 1
      %s987 = smul.addr %s986, 4
      %s988 = smul.addr %s987, 8
      %s989 = scalar_lea.vmem %s2, %s988
      %p990 = scmp.lt.s32.totalorder %s15, 1
      %s991 = scalar_select %p990, %s15, 1
      %s992 = smul.addr %s991, 2
      %s993 = smul.addr %s992, 8
      %s994 = scalar_lea.vmem %s3, %s993
      // Predicated region
      $region29: #{up_forward.3} parent=27 // pred_check
        %p995 = pneg %p80
      $region30: #{up_forward.3} parent=27 // pred_check_branch
        %997 = sbr.rel (%p995) target = $region32
      $region31: #{up_forward.3} parent=27 // pred_region
        _
      $region32: #{up_forward.3} parent=27 // pred_fallthru
        _
      // Predicated region
      $region33: #{up_forward.3} parent=27 // pred_check
        %p998 = pneg %p106
      $region34: #{up_forward.3} parent=27 // pred_check_branch
        %1000 = sbr.rel (%p998) target = $region36
      $region35: #{up_forward.3} parent=27 // pred_region
        _
      $region36: #{up_forward.3} parent=27 // pred_fallthru
        _
    $region28: #{up_forward.3} parent=5 // pred_fallthru
      _
    %p1001 = scmp.le.s32.totalorder 2, %s10
    // Predicated region
    $region37: #{up_forward.3} parent=5 // pred_check
      %p1002 = pneg %p1001
    $region38: #{up_forward.3} parent=5 // pred_check_branch
      %1004 = sbr.rel (%p1002) target = $region40
    $region39: #{up_forward.3} parent=5 // pred_region
      %s1005 = ssub.s32 %s10, 2
      // Predicated region
      $region41: #{up_forward.3} parent=39 // pred_check
        %p1006 = pneg %p86
      $region42: #{up_forward.3} parent=39 // pred_check_branch
        %1008 = sbr.rel (%p1006) target = $region44
      $region43: #{up_forward.3} parent=39 // pred_region
        %p1009 = scmp.lt.s32.totalorder %s16, 1
        %s1010 = scalar_select %p1009, %s16, 1
        %s1011 = smul.addr %s1010, 4
        %s1012 = smul.addr %s1011, 8
        %s1013 = scalar_lea.vmem %s2, %s1012
      $region44: #{up_forward.3} parent=39 // pred_fallthru
        _
      // Predicated region
      $region45: #{up_forward.3} parent=39 // pred_check
        %p1014 = pneg %p112
      $region46: #{up_forward.3} parent=39 // pred_check_branch
        %1016 = sbr.rel (%p1014) target = $region48
      $region47: #{up_forward.3} parent=39 // pred_region
        %p1017 = scmp.lt.s32.totalorder %s16, 1
        %s1018 = scalar_select %p1017, %s16, 1
        %s1019 = smul.addr %s1018, 2
        %s1020 = smul.addr %s1019, 8
        %s1021 = scalar_lea.vmem %s3, %s1020
      $region48: #{up_forward.3} parent=39 // pred_fallthru
        _
    $region40: #{up_forward.3} parent=5 // pred_fallthru
      _
  $region6: #{up_forward.3} parent=0 // loop_footer
    %s14 = sadd.s32 1, %s10
  $region7: #{up_forward.3} parent=0 // loop_footer_branch
    %9 = sbr.rel target = $region3
  $region8: #{up_forward.3} parent=0 // loop_exit
    _

// kernel: up_forward.5
$region0: #{up_forward.5}
  #allocation0 [shape = 'u32[]', space=smem, size = 0x4, offset = 0x4, fixed_abs, tag = 'smem constant byte address 0x4 - core index']
  #allocation1 [shape = 'u32[144,128]{1,0:T(1,128)}', space=vmem, size = 0x12000, scoped, tag = 'internal scratch']
  %s0 = inlined_call_operand.vmem [shape: f32[2,32,256], index: 0, kind: input, shape index: {}]
  %s1 = inlined_call_operand.vmem [shape: f32[32,1], index: 1, kind: input, shape index: {}]
  %s2 = inlined_call_operand.vmem [shape: f32[32,1], index: 2, kind: input, shape index: {}]
  %s3 = inlined_call_operand.vmem [shape: f32[2,32,256], index: 3, kind: output, shape index: {}]
  %s4 = sld [smem:[#allocation0]]
  $region45: #{up_forward.5} parent=0
    _
  %s6 = ssub.s32 1, %s4
  %s7 = scalar_select 0, %s6, %s4
  loop: start=0, step=1, limit=4
  $region2: #{up_forward.5} parent=0 // loop_pre_header
    _
  $region3: #{up_forward.5} parent=0 // loop_header
    %s9 = sphi 0, %s13
    %p10 = scmp.ge.s32.totalorder %s9, 4
    %s19 = sphi 0, %s21
    %s22 = sphi 0, %s19
    %s23 = sphi 0, %s22
    %s39 = sphi 0, %s23
    %s43 = sphi 0, %s43
    %s45 = sphi 0, %s43
    %s46 = sphi 0, %s45
    %s60 = sphi 0, %s46
    %s64 = sphi 0, %s64
    %s66 = sphi 0, %s64
    %s67 = sphi 0, %s66
    %s81 = sphi 0, %s67
    %s87 = sphi 0, %s89
    %s90 = sphi 0, %s87
    %s91 = sphi 0, %s90
    %s107 = sphi 0, %s91
  $region4: #{up_forward.5} parent=0 // loop_header_branch
    %12 = sbr.rel (%p10) target = $region8
  $region5: #{up_forward.5} parent=0 // loop_body
    %s14 = ssub.s32 %s9, 1
    %s15 = ssub.s32 %s9, 2
    %s16 = sadd.s32 %s9, 1
    %s17 = ssub.s32 %s9, %s16
    %p18 = scmp.eq.s32.totalorder %s17, 0
    %s20 = sadd.s32 %s19, 1
    %s21 = scalar_select %p18, %s19, %s20
    %p24 = pneg %p18
    %p25 = scmp.eq.s32.totalorder %s9, 1
    %p26 = por %p24, %p25
    %p27 = scmp.ne.s32.totalorder %s19, %s22
    %p28 = scmp.eq.s32.totalorder %s9, 0
    %p29 = por %p27, %p28
    %p30 = scmp.ne.s32.totalorder %s19, %s22
    %p31 = scmp.eq.s32.totalorder %s14, 1
    %p32 = por %p30, %p31
    %p33 = scmp.ne.s32.totalorder %s22, %s23
    %p34 = scmp.eq.s32.totalorder %s14, 0
    %p35 = por %p33, %p34
    %p36 = scmp.ne.s32.totalorder %s22, %s23
    %p37 = scmp.eq.s32.totalorder %s15, 1
    %p38 = por %p36, %p37
    %p40 = scmp.ne.s32.totalorder %s23, %s39
    %p41 = scmp.eq.s32.totalorder %s15, 0
    %p42 = por %p40, %p41
    %s44 = sadd.s32 %s43, 1
    %p47 = scmp.eq.s32.totalorder %s9, 1
    %p48 = scmp.ne.s32.totalorder %s43, %s45
    %p49 = scmp.eq.s32.totalorder %s9, 0
    %p50 = por %p48, %p49
    %p51 = scmp.ne.s32.totalorder %s43, %s45
    %p52 = scmp.eq.s32.totalorder %s14, 1
    %p53 = por %p51, %p52
    %p54 = scmp.ne.s32.totalorder %s45, %s46
    %p55 = scmp.eq.s32.totalorder %s14, 0
    %p56 = por %p54, %p55
    %p57 = scmp.ne.s32.totalorder %s45, %s46
    %p58 = scmp.eq.s32.totalorder %s15, 1
    %p59 = por %p57, %p58
    %p61 = scmp.ne.s32.totalorder %s46, %s60
    %p62 = scmp.eq.s32.totalorder %s15, 0
    %p63 = por %p61, %p62
    %s65 = sadd.s32 %s64, 1
    %p68 = scmp.eq.s32.totalorder %s9, 1
    %p69 = scmp.ne.s32.totalorder %s64, %s66
    %p70 = scmp.eq.s32.totalorder %s9, 0
    %p71 = por %p69, %p70
    %p72 = scmp.ne.s32.totalorder %s64, %s66
    %p73 = scmp.eq.s32.totalorder %s14, 1
    %p74 = por %p72, %p73
    %p75 = scmp.ne.s32.totalorder %s66, %s67
    %p76 = scmp.eq.s32.totalorder %s14, 0
    %p77 = por %p75, %p76
    %p78 = scmp.ne.s32.totalorder %s66, %s67
    %p79 = scmp.eq.s32.totalorder %s15, 1
    %p80 = por %p78, %p79
    %p82 = scmp.ne.s32.totalorder %s67, %s81
    %p83 = scmp.eq.s32.totalorder %s15, 0
    %p84 = por %p82, %p83
    %s85 = ssub.s32 %s9, %s16
    %p86 = scmp.eq.s32.totalorder %s85, 0
    %s88 = sadd.s32 %s87, 1
    %s89 = scalar_select %p86, %s87, %s88
    %p92 = pneg %p86
    %p93 = scmp.eq.s32.totalorder %s9, 1
    %p94 = por %p92, %p93
    %p95 = scmp.ne.s32.totalorder %s87, %s90
    %p96 = scmp.eq.s32.totalorder %s9, 0
    %p97 = por %p95, %p96
    %p98 = scmp.ne.s32.totalorder %s87, %s90
    %p99 = scmp.eq.s32.totalorder %s14, 1
    %p100 = por %p98, %p99
    %p101 = scmp.ne.s32.totalorder %s90, %s91
    %p102 = scmp.eq.s32.totalorder %s14, 0
    %p103 = por %p101, %p102
    %p104 = scmp.ne.s32.totalorder %s90, %s91
    %p105 = scmp.eq.s32.totalorder %s15, 1
    %p106 = por %p104, %p105
    %p108 = scmp.ne.s32.totalorder %s91, %s107
    %p109 = scmp.eq.s32.totalorder %s15, 0
    %p110 = por %p108, %p109
    %p111 = scmp.le.s32.totalorder 1, %s9
    %p112 = scmp.lt.s32.totalorder %s9, 3
    %p113 = pnand %p111, %p112
    %p114 = pneg %p113
    // Predicated region
    $region9: #{up_forward.5} parent=5 // pred_check
      _
    $region10: #{up_forward.5} parent=5 // pred_check_branch
      %116 = sbr.rel (%p113) target = $region12
    $region11: #{up_forward.5} parent=5 // pred_region
      %s117 = ssub.s32 %s9, 1
      // Predicated region
      $region13: #{up_forward.5} parent=11 // pred_check
        %p118 = pneg %p56
      $region14: #{up_forward.5} parent=11 // pred_check_branch
        %120 = sbr.rel (%p118) target = $region16
      $region15: #{up_forward.5} parent=11 // pred_region
        _
      $region16: #{up_forward.5} parent=11 // pred_fallthru
        _
      // Predicated region
      $region17: #{up_forward.5} parent=11 // pred_check
        %p121 = pneg %p77
      $region18: #{up_forward.5} parent=11 // pred_check_branch
        %123 = sbr.rel (%p121) target = $region20
      $region19: #{up_forward.5} parent=11 // pred_region
        _
      $region20: #{up_forward.5} parent=11 // pred_fallthru
        _
    $region12: #{up_forward.5} parent=5 // pred_fallthru
      _
    %p124 = scmp.lt.s32.totalorder %s9, 2
    // Predicated region
    $region21: #{up_forward.5} parent=5 // pred_check
      %p125 = pneg %p124
    $region22: #{up_forward.5} parent=5 // pred_check_branch
      %127 = sbr.rel (%p125) target = $region24
    $region23: #{up_forward.5} parent=5 // pred_region
      // Predicated region
      $region25: #{up_forward.5} parent=23 // pred_check
        %p128 = pneg %p29
      $region26: #{up_forward.5} parent=23 // pred_check_branch
        %130 = sbr.rel (%p128) target = $region28
      $region27: #{up_forward.5} parent=23 // pred_region
        %p131 = scmp.lt.s32.totalorder %s9, 1
        %s132 = scalar_select %p131, %s9, 1
        %s133 = smul.addr %s132, 8
        %s134 = smul.addr %s133, 8
        %s135 = scalar_lea.vmem %s0, %s134
      $region28: #{up_forward.5} parent=23 // pred_fallthru
        _
    $region24: #{up_forward.5} parent=5 // pred_fallthru
      _
    %p136 = scmp.le.s32.totalorder 1, %s9
    %p137 = scmp.lt.s32.totalorder %s9, 3
    %p138 = pnand %p136, %p137
    %p139 = pneg %p138
    // Predicated region
    $region29: #{up_forward.5} parent=5 // pred_check
      _
    $region30: #{up_forward.5} parent=5 // pred_check_branch
      %141 = sbr.rel (%p138) target = $region32
    $region31: #{up_forward.5} parent=5 // pred_region
      %s142 = ssub.s32 %s9, 1
      %p143 = scmp.lt.s32.totalorder %s14, 1
      %s144 = scalar_select %p143, %s14, 1
      %s145 = smul.addr %s144, 8
      %s146 = smul.addr %s145, 8
      %s147 = scalar_lea.vmem %s0, %s146
      %p148 = pneg %p35
      %p149 = pneg %p32
      %p150 = pneg %p56
      %p151 = pneg %p53
      %p152 = pneg %p77
      %p153 = pneg %p74
      %p154 = pneg %p103
      %p155 = pneg %p100
      %p156 = scmp.lt.s32.totalorder %s14, 1
      %s157 = scalar_select %p156, %s14, 1
      %s158 = smul.addr %s157, 8
      %s159 = smul.addr %s158, 8
      %s160 = scalar_lea.vmem %s3, %s159
      %p161 = scmp.lt.s32.totalorder %s14, 1
      %s162 = scalar_select %p161, %s14, 1
      %s163 = smul.addr %s162, 8
      %s164 = smul.addr %s163, 8
      %s165 = scalar_lea.vmem %s0, %s164
      %p166 = scmp.lt.s32.totalorder %s14, 1
      %s167 = scalar_select %p166, %s14, 1
      %s168 = smul.addr %s167, 8
      %s169 = smul.addr %s168, 8
      %s170 = scalar_lea.vmem %s3, %s169
      %v171 = vld [vmem:[%s165] sm:$0xff]
      %v172 = vld [vmem:[%s165 + $0x8] sm:$0xff]
      %v173 = vld [vmem:[%s165 + $0x10] sm:$0xff]
      %v174 = vld [vmem:[%s165 + $0x18] sm:$0xff]
      %v175 = vld [vmem:[%s165 + $0x20] sm:$0xff]
      %v176 = vld [vmem:[%s165 + $0x28] sm:$0xff]
      %v177 = vld [vmem:[%s165 + $0x30] sm:$0xff]
      %v178 = vld [vmem:[%s165 + $0x38] sm:$0xff]
      %v179 = vld [vmem:[%s1] sm:$0xff]
      %v180 = vld [vmem:[%s1 + $0x8] sm:$0xff]
      %v181 = vld [vmem:[%s1 + $0x10] sm:$0xff]
      %v182 = vld [vmem:[%s1 + $0x18] sm:$0xff]
      %184 = vset.pattern.permute.xlu0 0
      %185 = vperm.xlu0 %184, %v179
      %v186 = vpop.permute.xlu0 %185
      %189 = vset.pattern.permute.xlu0 0
      %190 = vperm.xlu0 %189, %v180
      %v191 = vpop.permute.xlu0 %190
      %194 = vset.pattern.permute.xlu0 0
      %195 = vperm.xlu0 %194, %v181
      %v196 = vpop.permute.xlu0 %195
      %199 = vset.pattern.permute.xlu0 0
      %200 = vperm.xlu0 %199, %v182
      %v201 = vpop.permute.xlu0 %200
      %v203 = vmul.f32 %v171, %v186
      %v204 = vmul.f32 %v172, %v186
      %v205 = vmul.f32 %v173, %v191
      %v206 = vmul.f32 %v174, %v191
      %v207 = vmul.f32 %v175, %v196
      %v208 = vmul.f32 %v176, %v196
      %v209 = vmul.f32 %v177, %v201
      %v210 = vmul.f32 %v178, %v201
      %v211 = vld [vmem:[%s2] sm:$0xff]
      %v212 = vld [vmem:[%s2 + $0x8] sm:$0xff]
      %v213 = vld [vmem:[%s2 + $0x10] sm:$0xff]
      %v214 = vld [vmem:[%s2 + $0x18] sm:$0xff]
      %216 = vset.pattern.permute.xlu0 0
      %217 = vperm.xlu0 %216, %v211
      %v218 = vpop.permute.xlu0 %217
      %221 = vset.pattern.permute.xlu0 0
      %222 = vperm.xlu0 %221, %v212
      %v223 = vpop.permute.xlu0 %222
      %226 = vset.pattern.permute.xlu0 0
      %227 = vperm.xlu0 %226, %v213
      %v228 = vpop.permute.xlu0 %227
      %231 = vset.pattern.permute.xlu0 0
      %232 = vperm.xlu0 %231, %v214
      %v233 = vpop.permute.xlu0 %232
      %v235 = vadd.f32 %v203, %v218
      %v236 = vadd.f32 %v204, %v218
      %v237 = vadd.f32 %v205, %v223
      %v238 = vadd.f32 %v206, %v223
      %v239 = vadd.f32 %v207, %v228
      %v240 = vadd.f32 %v208, %v228
      %v241 = vadd.f32 %v209, %v233
      %v242 = vadd.f32 %v210, %v233
      %v243 = vmax.f32 %v235, 0.0
      %v244 = vmax.f32 %v236, 0.0
      %v245 = vmax.f32 %v237, 0.0
      %v246 = vmax.f32 %v238, 0.0
      %v247 = vmax.f32 %v239, 0.0
      %v248 = vmax.f32 %v240, 0.0
      %v249 = vmax.f32 %v241, 0.0
      %v250 = vmax.f32 %v242, 0.0
      %251 = vst [vmem:[%s170] sm:$0xff] %v243
      %252 = vst [vmem:[%s170 + $0x8] sm:$0xff] %v244
      %253 = vst [vmem:[%s170 + $0x10] sm:$0xff] %v245
      %254 = vst [vmem:[%s170 + $0x18] sm:$0xff] %v246
      %255 = vst [vmem:[%s170 + $0x20] sm:$0xff] %v247
      %256 = vst [vmem:[%s170 + $0x28] sm:$0xff] %v248
      %257 = vst [vmem:[%s170 + $0x30] sm:$0xff] %v249
      %258 = vst [vmem:[%s170 + $0x38] sm:$0xff] %v250
      %p259 = scmp.lt.s32.totalorder %s14, 1
      %s260 = scalar_select %p259, %s14, 1
      %s261 = smul.addr %s260, 8
      %s262 = smul.addr %s261, 8
      %s263 = scalar_lea.vmem %s3, %s262
      // Predicated region
      $region33: #{up_forward.5} parent=31 // pred_check
        %p264 = pneg %p100
      $region34: #{up_forward.5} parent=31 // pred_check_branch
        %266 = sbr.rel (%p264) target = $region36
      $region35: #{up_forward.5} parent=31 // pred_region
        _
      $region36: #{up_forward.5} parent=31 // pred_fallthru
        _
    $region32: #{up_forward.5} parent=5 // pred_fallthru
      _
    %p267 = scmp.le.s32.totalorder 2, %s9
    // Predicated region
    $region37: #{up_forward.5} parent=5 // pred_check
      %p268 = pneg %p267
    $region38: #{up_forward.5} parent=5 // pred_check_branch
      %270 = sbr.rel (%p268) target = $region40
    $region39: #{up_forward.5} parent=5 // pred_region
      %s271 = ssub.s32 %s9, 2
      // Predicated region
      $region41: #{up_forward.5} parent=39 // pred_check
        %p272 = pneg %p106
      $region42: #{up_forward.5} parent=39 // pred_check_branch
        %274 = sbr.rel (%p272) target = $region44
      $region43: #{up_forward.5} parent=39 // pred_region
        %p275 = scmp.lt.s32.totalorder %s15, 1
        %s276 = scalar_select %p275, %s15, 1
        %s277 = smul.addr %s276, 8
        %s278 = smul.addr %s277, 8
        %s279 = scalar_lea.vmem %s3, %s278
      $region44: #{up_forward.5} parent=39 // pred_fallthru
        _
    $region40: #{up_forward.5} parent=5 // pred_fallthru
      _
  $region6: #{up_forward.5} parent=0 // loop_footer
    %s13 = sadd.s32 1, %s9
  $region7: #{up_forward.5} parent=0 // loop_footer_branch
    %8 = sbr.rel target = $region3
  $region8: #{up_forward.5} parent=0 // loop_exit
    _

</llo_original>
